<compile_context>
chip_gen: v5e
topology: v5e:2x2
jax: 0.10.0
libtpu: 0.0.40
codegen_flags: <defaults>
</compile_context>

<pallas_src>
import jax
import jax.numpy as jnp
from jax import lax
from jax.experimental import pallas as pl
from jax.experimental.pallas import tpu as pltpu

HIDDEN = 8192
NEG_SLOPE = 0.01  # PyTorch nn.LeakyReLU default negative_slope


def _mlp_kernel(x_ref, w1_ref, b1_ref, w2t_ref, b2_ref, o_ref):
    # Cast activations to bf16 only at the MXU input; accumulate in f32.
    x_lo = x_ref[...].astype(jnp.bfloat16)
    h = jnp.dot(x_lo, w1_ref[...], preferred_element_type=jnp.float32)
    h = h + b1_ref[...]                    # (1, H) f32 bias broadcasts over batch
    h = jnp.maximum(h, NEG_SLOPE * h)      # LeakyReLU (valid since slope < 1)
    # Second layer with W2 stored transposed (C, H): contract both operands on
    # their lane (last) dim -> lane-dense weight stream, K=8192 on lanes.
    y = lax.dot_general(
        h.astype(w2t_ref.dtype), w2t_ref[...],
        dimension_numbers=(((1,), (1,)), ((), ())),
        preferred_element_type=jnp.float32)
    o_ref[...] = (y + b2_ref[...]).astype(o_ref.dtype)


def prepare_params(w1, b1, w2, b2):
    """One-time (outside the hot path) conversion of PyTorch-layout parameters
    to the kernel's layouts: bf16 weights (W2 transposed to (C, H)), f32 2-D
    biases.  Amortizes the cast across all subsequent calls."""
    H = w1.shape[1]
    C = w2.shape[1]
    w1_lo = w1.astype(jnp.bfloat16)                 # (D, H)
    w2t_lo = jnp.transpose(w2).astype(jnp.bfloat16)  # (C, H) lane-dense
    b1_2d = b1.reshape(1, H).astype(jnp.float32)
    b2_2d = b2.reshape(1, C).astype(jnp.float32)
    return w1_lo, b1_2d, w2t_lo, b2_2d


def _hbm_bytes(shape, dtype):
    """Lane-padded HBM footprint estimate: minor dim rounded up to 128."""
    *lead, minor = shape
    n = 1
    for d in lead:
        n *= d
    n *= ((minor + 127) // 128) * 128
    return n * jnp.dtype(dtype).itemsize


def wide_classifier2(x, params):
    """x: (B, latent_dim) f32; params from prepare_params().
    Returns (B, n_classes) f32."""
    w1_lo, b1_2d, w2t_lo, b2_2d = params
    B, D = x.shape
    H = w1_lo.shape[1]
    C = w2t_lo.shape[0]

    flops = 2 * B * (D * H + H * C)
    bytes_accessed = (
        _hbm_bytes((B, D), x.dtype)
        + _hbm_bytes((D, H), jnp.bfloat16)
        + _hbm_bytes((1, H), jnp.float32)
        + _hbm_bytes((C, H), jnp.bfloat16)
        + _hbm_bytes((1, C), jnp.float32)
        + _hbm_bytes((B, C), jnp.float32)
    )
    cost = pl.CostEstimate(flops=flops, transcendentals=0,
                           bytes_accessed=bytes_accessed)

    return pl.pallas_call(
        _mlp_kernel,
        out_shape=jax.ShapeDtypeStruct((B, C), x.dtype),
        grid_spec=pltpu.PrefetchScalarGridSpec(
            num_scalar_prefetch=0,
            grid=(1,),  # single step: entire working set resident in VMEM
            in_specs=[
                pl.BlockSpec((B, D), lambda k: (0, 0)),   # x (full, f32)
                pl.BlockSpec((D, H), lambda k: (0, 0)),   # W1 (full, bf16)
                pl.BlockSpec((1, H), lambda k: (0, 0)),   # b1 (full, f32)
                pl.BlockSpec((C, H), lambda k: (0, 0)),   # W2ᵀ (full, bf16)
                pl.BlockSpec((1, C), lambda k: (0, 0)),   # b2 (full, f32)
            ],
            out_specs=pl.BlockSpec((B, C), lambda k: (0, 0)),
        ),
        compiler_params=pltpu.CompilerParams(
            dimension_semantics=("arbitrary",),
        ),
        cost_estimate=cost,
    )(x, w1_lo, b1_2d, w2t_lo, b2_2d)


def _init_linear(key, fan_in, fan_out):
    """Deterministic init mimicking PyTorch nn.Linear default:
    U(-1/sqrt(fan_in), 1/sqrt(fan_in)) for both weight and bias."""
    kw, kb = jax.random.split(key)
    bound = 1.0 / jnp.sqrt(float(fan_in))
    w = jax.random.uniform(kw, (fan_in, fan_out), jnp.float32, -bound, bound)
    b = jax.random.uniform(kb, (fan_out,), jnp.float32, -bound, bound)
    return w, b


def reference(x, w1, b1, w2, b2):
    """Pure-JAX reference mirroring the kernel's bf16 rounding at the MXU
    inputs (weights and activations), with f32 accumulation / elementwise."""
    xr = x.astype(jnp.bfloat16).astype(jnp.float32)
    w1r = w1.astype(jnp.bfloat16).astype(jnp.float32)
    w2r = w2.astype(jnp.bfloat16).astype(jnp.float32)
    h = jnp.dot(xr, w1r, precision=lax.Precision.HIGHEST) + b1
    h = jnp.maximum(h, NEG_SLOPE * h)
    hr = h.astype(jnp.bfloat16).astype(jnp.float32)
    return jnp.dot(hr, w2r, precision=lax.Precision.HIGHEST) + b2


if __name__ == "__main__":
    batch = 2
    latent_dim = 32
    n_classes = 10

    key = jax.random.PRNGKey(0)
    kx, k1, k2 = jax.random.split(key, 3)

    x = jax.random.normal(kx, (batch, latent_dim), jnp.float32)
    w1, b1 = _init_linear(k1, latent_dim, HIDDEN)
    w2, b2 = _init_linear(k2, HIDDEN, n_classes)

    # One-time parameter preparation (cast + W2 transpose) outside the hot path.
    params = jax.block_until_ready(prepare_params(w1, b1, w2, b2))

    out = wide_classifier2(x, params)
    out = jax.block_until_ready(out)

    ref = reference(x, w1, b1, w2, b2)
    assert out.shape == (batch, n_classes)
    # Both paths use bf16-exact matmul operands with f32 accumulation; the only
    # differences are summation order and occasional one-ulp bf16 rounding
    # flips of the hidden activations, so 1e-3 is a comfortable bound.
    assert jnp.allclose(out, ref, atol=1e-3, rtol=1e-3), "mismatch vs reference"

    print("KERNEL_OK")
</pallas_src>

<mosaic_0001>
module attributes {stable_mosaic.version = 11 : i64} {
  func.func @_mlp_kernel(%arg0: i32, %arg1: memref<2x32xf32, #tpu.memory_space<vmem>>, %arg2: memref<32x8192xbf16, #tpu.memory_space<vmem>>, %arg3: memref<1x8192xf32, #tpu.memory_space<vmem>>, %arg4: memref<10x8192xbf16, #tpu.memory_space<vmem>>, %arg5: memref<1x10xf32, #tpu.memory_space<vmem>>, %arg6: memref<2x10xf32, #tpu.memory_space<vmem>>) attributes {dimension_semantics = [#tpu.dimension_semantics<arbitrary>], iteration_bounds = array<i64: 1>, scalar_prefetch = 0 : i64, scratch_operands = 0 : i64, tpu.core_type = #tpu.core_type<tc>, window_params = [{pipeline_mode = #tpu.pipeline_mode<synchronous>, transform_indices = @transform_0, window_bounds = array<i64: 2, 32>}, {pipeline_mode = #tpu.pipeline_mode<synchronous>, transform_indices = @transform_1, window_bounds = array<i64: 32, 8192>}, {pipeline_mode = #tpu.pipeline_mode<synchronous>, transform_indices = @transform_2, window_bounds = array<i64: 1, 8192>}, {pipeline_mode = #tpu.pipeline_mode<synchronous>, transform_indices = @transform_3, window_bounds = array<i64: 10, 8192>}, {pipeline_mode = #tpu.pipeline_mode<synchronous>, transform_indices = @transform_4, window_bounds = array<i64: 1, 10>}, {pipeline_mode = #tpu.pipeline_mode<synchronous>, transform_indices = @transform_5, window_bounds = array<i64: 2, 10>}]} {
    %c0 = arith.constant 0 : index
    %c0_0 = arith.constant 0 : index
    %0 = vector.load %arg1[%c0, %c0_0] : memref<2x32xf32, #tpu.memory_space<vmem>>, vector<2x32xf32>
    %1 = arith.truncf %0 : vector<2x32xf32> to vector<2x32xbf16>
    %c0_1 = arith.constant 0 : index
    %c0_2 = arith.constant 0 : index
    %2 = vector.load %arg2[%c0_1, %c0_2] : memref<32x8192xbf16, #tpu.memory_space<vmem>>, vector<32x8192xbf16>
    %cst = arith.constant dense<0.000000e+00> : vector<2x8192xf32>
    %3 = tpu.matmul %1, %2, %cst {dimension_numbers = #tpu.dot_dimension_numbers<[1], [0], [0], [1], [0, 0, 1, 1], [], []>} : vector<2x32xbf16>, vector<32x8192xbf16>, vector<2x8192xf32> -> vector<2x8192xf32>
    %c0_3 = arith.constant 0 : index
    %c0_4 = arith.constant 0 : index
    %4 = vector.load %arg3[%c0_3, %c0_4] : memref<1x8192xf32, #tpu.memory_space<vmem>>, vector<1x8192xf32>
    %5 = vector.broadcast %4 : vector<1x8192xf32> to vector<2x8192xf32>
    %6 = arith.addf %3, %5 : vector<2x8192xf32>
    %cst_5 = arith.constant 0.00999999977 : f32
    %7 = vector.broadcast %cst_5 : f32 to vector<2x8192xf32>
    %8 = arith.mulf %7, %6 : vector<2x8192xf32>
    %9 = arith.maximumf %6, %8 : vector<2x8192xf32>
    %10 = arith.truncf %9 : vector<2x8192xf32> to vector<2x8192xbf16>
    %c0_6 = arith.constant 0 : index
    %c0_7 = arith.constant 0 : index
    %11 = vector.load %arg4[%c0_6, %c0_7] : memref<10x8192xbf16, #tpu.memory_space<vmem>>, vector<10x8192xbf16>
    %cst_8 = arith.constant dense<0.000000e+00> : vector<2x10xf32>
    %12 = tpu.matmul %10, %11, %cst_8 {dimension_numbers = #tpu.dot_dimension_numbers<[1], [1], [0], [0], [0, 0, 1, 0], [], []>} : vector<2x8192xbf16>, vector<10x8192xbf16>, vector<2x10xf32> -> vector<2x10xf32>
    %c0_9 = arith.constant 0 : index
    %c0_10 = arith.constant 0 : index
    %13 = vector.load %arg5[%c0_9, %c0_10] : memref<1x10xf32, #tpu.memory_space<vmem>>, vector<1x10xf32>
    %14 = vector.broadcast %13 : vector<1x10xf32> to vector<2x10xf32>
    %15 = arith.addf %12, %14 : vector<2x10xf32>
    %c0_11 = arith.constant 0 : index
    %c0_12 = arith.constant 0 : index
    %16 = vector.load %arg6[%c0_11, %c0_12] : memref<2x10xf32, #tpu.memory_space<vmem>>, vector<2x10xf32>
    tpu.vector_store %arg6[%c0_11, %c0_12], %15 {strides = array<i32>} : memref<2x10xf32, #tpu.memory_space<vmem>>, vector<2x10xf32>,
    return
  }
  func.func @transform_0(%arg0: i32) -> (i32, i32) {
    %c0_i32 = arith.constant 0 : i32
    %c0_i32_0 = arith.constant 0 : i32
    %c0_i32_1 = arith.constant 0 : i32
    return %c0_i32, %c0_i32_0 : i32, i32
  }
  func.func @transform_1(%arg0: i32) -> (i32, i32) {
    %c0_i32 = arith.constant 0 : i32
    %c0_i32_0 = arith.constant 0 : i32
    %c0_i32_1 = arith.constant 0 : i32
    return %c0_i32, %c0_i32_0 : i32, i32
  }
  func.func @transform_2(%arg0: i32) -> (i32, i32) {
    %c0_i32 = arith.constant 0 : i32
    %c0_i32_0 = arith.constant 0 : i32
    %c0_i32_1 = arith.constant 0 : i32
    return %c0_i32, %c0_i32_0 : i32, i32
  }
  func.func @transform_3(%arg0: i32) -> (i32, i32) {
    %c0_i32 = arith.constant 0 : i32
    %c0_i32_0 = arith.constant 0 : i32
    %c0_i32_1 = arith.constant 0 : i32
    return %c0_i32, %c0_i32_0 : i32, i32
  }
  func.func @transform_4(%arg0: i32) -> (i32, i32) {
    %c0_i32 = arith.constant 0 : i32
    %c0_i32_0 = arith.constant 0 : i32
    %c0_i32_1 = arith.constant 0 : i32
    return %c0_i32, %c0_i32_0 : i32, i32
  }
  func.func @transform_5(%arg0: i32) -> (i32, i32) {
    %c0_i32 = arith.constant 0 : i32
    %c0_i32_0 = arith.constant 0 : i32
    %c0_i32_1 = arith.constant 0 : i32
    return %c0_i32, %c0_i32_0 : i32, i32
  }
}

</mosaic_0001>

<llo_original>
// kernel: tpu_custom_call.1
$region0: #{tpu_custom_call.1}
  #allocation0 [shape = 'u32[]', space=smem, size = 0x4, offset = 0x4, fixed_abs, tag = 'smem constant byte address 0x4 - core index']
  #allocation1 [shape = 'u32[72,128]{1,0:T(1,128)}', space=vmem, size = 0x9000, scoped, tag = 'internal scratch']
  %s0 = inlined_call_operand.hbm [shape: f32[2,32], index: 0, kind: input, shape index: {}]
  %s1 = inlined_call_operand.hbm [shape: bf16[32,8192], index: 1, kind: input, shape index: {}]
  %s2 = inlined_call_operand.hbm [shape: f32[1,8192], index: 2, kind: input, shape index: {}]
  %s3 = inlined_call_operand.hbm [shape: bf16[10,8192], index: 3, kind: input, shape index: {}]
  %s4 = inlined_call_operand.vmem [shape: f32[1,10], index: 4, kind: input, shape index: {}]
  %s5 = inlined_call_operand.hbm [shape: f32[2,10], index: 5, kind: output, shape index: {}]
  %s6 = sld [smem:[#allocation0]]
  $region46: #{tpu_custom_call.1} parent=0
    _
  %s8 = ssub.s32 1, %s6
  %s9 = scalar_select 0, %s8, %s6
  $region1: #{tpu_custom_call.1} parent=0
    #allocation2 [shape = 'u8[1024]{0}', space=vmem, size = 0x400, scoped, tag = 'input window, operand 0, single buffered']
    #allocation3 [shape = 's32[1]{0}', space=sflag, size = 0x4, scoped, tag = 'scoped memory for tpu_custom_call.1']
    #allocation4 [shape = 's32[1]{0}', space=sflag, size = 0x4, scoped, tag = 'scoped memory for tpu_custom_call.1']
    #allocation5 [shape = 'u8[524288]{0}', space=vmem, size = 0x80000, scoped, tag = 'input window, operand 1, single buffered']
    #allocation6 [shape = 's32[1]{0}', space=sflag, size = 0x4, scoped, tag = 'scoped memory for tpu_custom_call.1']
    #allocation7 [shape = 'u8[32768]{0}', space=vmem, size = 0x8000, scoped, tag = 'input window, operand 2, single buffered']
    #allocation8 [shape = 'u8[262144]{0}', space=vmem, size = 0x40000, scoped, tag = 'input window, operand 3, single buffered']
    #allocation9 [shape = 's32[1]{0}', space=sflag, size = 0x4, scoped, tag = 'scoped memory for tpu_custom_call.1']
    #allocation10 [shape = 'u8[1024]{0}', space=vmem, size = 0x400, scoped, tag = 'output window, operand 0, single buffered']
    %10 = vsyncpa [#allocation3], 0
    %11 = vsyncpa [#allocation6], 0
    %12 = vsyncpa [#allocation9], 0
    %13 = vsyncpa [#allocation4], 0
    // Predicated region
    $region2: #{tpu_custom_call.1} parent=1 // pred_check
      _
    $region3: #{tpu_custom_call.1} parent=1 // pred_check_branch
      %15 = sbr.rel (0) target = $region5
    $region4: #{tpu_custom_call.1} parent=1 // pred_region
      %17 = vsyncadd [#allocation3], 0
      %s19 = sshll.u32 %s0, 4
      %s20 = int_to_ptr.hbm [resolvable:$true] %s19
      %s21 = sshll.u32 [#allocation2], 4
      %s22 = int_to_ptr.vmem [resolvable:$true] %s21
      %24 = dma.hbm_to_vmem [thread:$0]  %s20, 32, %s22, [#allocation3]
    $region5: #{tpu_custom_call.1} parent=1 // pred_fallthru
      _
    // Predicated region
    $region6: #{tpu_custom_call.1} parent=1 // pred_check
      _
    $region7: #{tpu_custom_call.1} parent=1 // pred_check_branch
      %26 = sbr.rel (0) target = $region9
    $region8: #{tpu_custom_call.1} parent=1 // pred_region
      %28 = vsyncadd [#allocation6], 0
      %s29 = sshll.u32 %s1, 4
      %s30 = int_to_ptr.hbm [resolvable:$true] %s29
      %s31 = sshll.u32 [#allocation5], 4
      %s32 = int_to_ptr.vmem [resolvable:$true] %s31
      %37 = dma.hbm_to_vmem [thread:$0]  %s30, 16384, %s32, [#allocation6], 4096, 4096, 256
    $region9: #{tpu_custom_call.1} parent=1 // pred_fallthru
      _
    // Predicated region
    $region10: #{tpu_custom_call.1} parent=1 // pred_check
      _
    $region11: #{tpu_custom_call.1} parent=1 // pred_check_branch
      %39 = sbr.rel (0) target = $region13
    $region12: #{tpu_custom_call.1} parent=1 // pred_region
      %41 = vsyncadd [#allocation6], 0
      %s43 = sshll.u32 %s2, 4
      %s44 = int_to_ptr.hbm [resolvable:$true] %s43
      %s45 = sshll.u32 [#allocation7], 4
      %s46 = int_to_ptr.vmem [resolvable:$true] %s45
      %48 = dma.hbm_to_vmem [thread:$0]  %s44, 1024, %s46, [#allocation6]
    $region13: #{tpu_custom_call.1} parent=1 // pred_fallthru
      _
    // Predicated region
    $region14: #{tpu_custom_call.1} parent=1 // pred_check
      _
    $region15: #{tpu_custom_call.1} parent=1 // pred_check_branch
      %50 = sbr.rel (0) target = $region17
    $region16: #{tpu_custom_call.1} parent=1 // pred_region
      %52 = vsyncadd [#allocation9], 0
      %s53 = sshll.u32 %s3, 4
      %s54 = int_to_ptr.hbm [resolvable:$true] %s53
      %s55 = sshll.u32 [#allocation8], 4
      %s56 = int_to_ptr.vmem [resolvable:$true] %s55
      %61 = dma.hbm_to_vmem [thread:$0]  %s54, 8192, %s56, [#allocation9], 4096, 4096, 256
    $region17: #{tpu_custom_call.1} parent=1 // pred_fallthru
      _
    // Predicated region
    $region18: #{tpu_custom_call.1} parent=1 // pred_check
      _
    $region19: #{tpu_custom_call.1} parent=1 // pred_check_branch
      %63 = sbr.rel (0) target = $region21
    $region20: #{tpu_custom_call.1} parent=1 // pred_region
      _
    $region21: #{tpu_custom_call.1} parent=1 // pred_fallthru
      _
    // Predicated region
    $region22: #{tpu_custom_call.1} parent=1 // pred_check
      _
    $region23: #{tpu_custom_call.1} parent=1 // pred_check_branch
      %65 = sbr.rel (0) target = $region25
    $region24: #{tpu_custom_call.1} parent=1 // pred_region
      %67 = dma.done [#allocation3], 32
    $region25: #{tpu_custom_call.1} parent=1 // pred_fallthru
      _
    // Predicated region
    $region26: #{tpu_custom_call.1} parent=1 // pred_check
      _
    $region27: #{tpu_custom_call.1} parent=1 // pred_check_branch
      %69 = sbr.rel (0) target = $region29
    $region28: #{tpu_custom_call.1} parent=1 // pred_region
      %71 = dma.done [#allocation6], 16384
    $region29: #{tpu_custom_call.1} parent=1 // pred_fallthru
      _
    // Predicated region
    $region30: #{tpu_custom_call.1} parent=1 // pred_check
      _
    $region31: #{tpu_custom_call.1} parent=1 // pred_check_branch
      %73 = sbr.rel (0) target = $region33
    $region32: #{tpu_custom_call.1} parent=1 // pred_region
      %75 = dma.done [#allocation6], 1024
    $region33: #{tpu_custom_call.1} parent=1 // pred_fallthru
      _
    // Predicated region
    $region34: #{tpu_custom_call.1} parent=1 // pred_check
      _
    $region35: #{tpu_custom_call.1} parent=1 // pred_check_branch
      %77 = sbr.rel (0) target = $region37
    $region36: #{tpu_custom_call.1} parent=1 // pred_region
      %79 = dma.done [#allocation9], 8192
    $region37: #{tpu_custom_call.1} parent=1 // pred_fallthru
      _
    %v81 = vld [vmem:[#allocation2] sm:$0x3]
    %v82 = vpack.c.bf16 %v81, %v81
    %v83 = vld [vmem:[#allocation5] sm:$0xff]
    %v84 = vld [vmem:[#allocation5 + $0x8] sm:$0xff]
    %v85 = vld [vmem:[#allocation5 + $0x10] sm:$0xff]
    %v86 = vld [vmem:[#allocation5 + $0x18] sm:$0xff]
    %v87 = vld [vmem:[#allocation5 + $0x20] sm:$0xff]
    %v88 = vld [vmem:[#allocation5 + $0x28] sm:$0xff]
    %v89 = vld [vmem:[#allocation5 + $0x30] sm:$0xff]
    %v90 = vld [vmem:[#allocation5 + $0x38] sm:$0xff]
    %v91 = vld [vmem:[#allocation5 + $0x40] sm:$0xff]
    %v92 = vld [vmem:[#allocation5 + $0x48] sm:$0xff]
    %v93 = vld [vmem:[#allocation5 + $0x50] sm:$0xff]
    %v94 = vld [vmem:[#allocation5 + $0x58] sm:$0xff]
    %v95 = vld [vmem:[#allocation5 + $0x60] sm:$0xff]
    %v96 = vld [vmem:[#allocation5 + $0x68] sm:$0xff]
    %v97 = vld [vmem:[#allocation5 + $0x70] sm:$0xff]
    %v98 = vld [vmem:[#allocation5 + $0x78] sm:$0xff]
    %v99 = vld [vmem:[#allocation5 + $0x80] sm:$0xff]
    %v100 = vld [vmem:[#allocation5 + $0x88] sm:$0xff]
    %v101 = vld [vmem:[#allocation5 + $0x90] sm:$0xff]
    %v102 = vld [vmem:[#allocation5 + $0x98] sm:$0xff]
    %v103 = vld [vmem:[#allocation5 + $0xa0] sm:$0xff]
    %v104 = vld [vmem:[#allocation5 + $0xa8] sm:$0xff]
    %v105 = vld [vmem:[#allocation5 + $0xb0] sm:$0xff]
    %v106 = vld [vmem:[#allocation5 + $0xb8] sm:$0xff]
    %v107 = vld [vmem:[#allocation5 + $0xc0] sm:$0xff]
    %v108 = vld [vmem:[#allocation5 + $0xc8] sm:$0xff]
    %v109 = vld [vmem:[#allocation5 + $0xd0] sm:$0xff]
    %v110 = vld [vmem:[#allocation5 + $0xd8] sm:$0xff]
    %v111 = vld [vmem:[#allocation5 + $0xe0] sm:$0xff]
    %v112 = vld [vmem:[#allocation5 + $0xe8] sm:$0xff]
    %v113 = vld [vmem:[#allocation5 + $0xf0] sm:$0xff]
    %v114 = vld [vmem:[#allocation5 + $0xf8] sm:$0xff]
    %v115 = vld [vmem:[#allocation5 + $0x100] sm:$0xff]
    %v116 = vld [vmem:[#allocation5 + $0x108] sm:$0xff]
    %v117 = vld [vmem:[#allocation5 + $0x110] sm:$0xff]
    %v118 = vld [vmem:[#allocation5 + $0x118] sm:$0xff]
    %v119 = vld [vmem:[#allocation5 + $0x120] sm:$0xff]
    %v120 = vld [vmem:[#allocation5 + $0x128] sm:$0xff]
    %v121 = vld [vmem:[#allocation5 + $0x130] sm:$0xff]
    %v122 = vld [vmem:[#allocation5 + $0x138] sm:$0xff]
    %v123 = vld [vmem:[#allocation5 + $0x140] sm:$0xff]
    %v124 = vld [vmem:[#allocation5 + $0x148] sm:$0xff]
    %v125 = vld [vmem:[#allocation5 + $0x150] sm:$0xff]
    %v126 = vld [vmem:[#allocation5 + $0x158] sm:$0xff]
    %v127 = vld [vmem:[#allocation5 + $0x160] sm:$0xff]
    %v128 = vld [vmem:[#allocation5 + $0x168] sm:$0xff]
    %v129 = vld [vmem:[#allocation5 + $0x170] sm:$0xff]
    %v130 = vld [vmem:[#allocation5 + $0x178] sm:$0xff]
    %v131 = vld [vmem:[#allocation5 + $0x180] sm:$0xff]
    %v132 = vld [vmem:[#allocation5 + $0x188] sm:$0xff]
    %v133 = vld [vmem:[#allocation5 + $0x190] sm:$0xff]
    %v134 = vld [vmem:[#allocation5 + $0x198] sm:$0xff]
    %v135 = vld [vmem:[#allocation5 + $0x1a0] sm:$0xff]
    %v136 = vld [vmem:[#allocation5 + $0x1a8] sm:$0xff]
    %v137 = vld [vmem:[#allocation5 + $0x1b0] sm:$0xff]
    %v138 = vld [vmem:[#allocation5 + $0x1b8] sm:$0xff]
    %v139 = vld [vmem:[#allocation5 + $0x1c0] sm:$0xff]
    %v140 = vld [vmem:[#allocation5 + $0x1c8] sm:$0xff]
    %v141 = vld [vmem:[#allocation5 + $0x1d0] sm:$0xff]
    %v142 = vld [vmem:[#allocation5 + $0x1d8] sm:$0xff]
    %v143 = vld [vmem:[#allocation5 + $0x1e0] sm:$0xff]
    %v144 = vld [vmem:[#allocation5 + $0x1e8] sm:$0xff]
    %v145 = vld [vmem:[#allocation5 + $0x1f0] sm:$0xff]
    %v146 = vld [vmem:[#allocation5 + $0x1f8] sm:$0xff]
    %v147 = vld [vmem:[#allocation5 + $0x200] sm:$0xff]
    %v148 = vld [vmem:[#allocation5 + $0x208] sm:$0xff]
    %v149 = vld [vmem:[#allocation5 + $0x210] sm:$0xff]
    %v150 = vld [vmem:[#allocation5 + $0x218] sm:$0xff]
    %v151 = vld [vmem:[#allocation5 + $0x220] sm:$0xff]
    %v152 = vld [vmem:[#allocation5 + $0x228] sm:$0xff]
    %v153 = vld [vmem:[#allocation5 + $0x230] sm:$0xff]
    %v154 = vld [vmem:[#allocation5 + $0x238] sm:$0xff]
    %v155 = vld [vmem:[#allocation5 + $0x240] sm:$0xff]
    %v156 = vld [vmem:[#allocation5 + $0x248] sm:$0xff]
    %v157 = vld [vmem:[#allocation5 + $0x250] sm:$0xff]
    %v158 = vld [vmem:[#allocation5 + $0x258] sm:$0xff]
    %v159 = vld [vmem:[#allocation5 + $0x260] sm:$0xff]
    %v160 = vld [vmem:[#allocation5 + $0x268] sm:$0xff]
    %v161 = vld [vmem:[#allocation5 + $0x270] sm:$0xff]
    %v162 = vld [vmem:[#allocation5 + $0x278] sm:$0xff]
    %v163 = vld [vmem:[#allocation5 + $0x280] sm:$0xff]
    %v164 = vld [vmem:[#allocation5 + $0x288] sm:$0xff]
    %v165 = vld [vmem:[#allocation5 + $0x290] sm:$0xff]
    %v166 = vld [vmem:[#allocation5 + $0x298] sm:$0xff]
    %v167 = vld [vmem:[#allocation5 + $0x2a0] sm:$0xff]
    %v168 = vld [vmem:[#allocation5 + $0x2a8] sm:$0xff]
    %v169 = vld [vmem:[#allocation5 + $0x2b0] sm:$0xff]
    %v170 = vld [vmem:[#allocation5 + $0x2b8] sm:$0xff]
    %v171 = vld [vmem:[#allocation5 + $0x2c0] sm:$0xff]
    %v172 = vld [vmem:[#allocation5 + $0x2c8] sm:$0xff]
    %v173 = vld [vmem:[#allocation5 + $0x2d0] sm:$0xff]
    %v174 = vld [vmem:[#allocation5 + $0x2d8] sm:$0xff]
    %v175 = vld [vmem:[#allocation5 + $0x2e0] sm:$0xff]
    %v176 = vld [vmem:[#allocation5 + $0x2e8] sm:$0xff]
    %v177 = vld [vmem:[#allocation5 + $0x2f0] sm:$0xff]
    %v178 = vld [vmem:[#allocation5 + $0x2f8] sm:$0xff]
    %v179 = vld [vmem:[#allocation5 + $0x300] sm:$0xff]
    %v180 = vld [vmem:[#allocation5 + $0x308] sm:$0xff]
    %v181 = vld [vmem:[#allocation5 + $0x310] sm:$0xff]
    %v182 = vld [vmem:[#allocation5 + $0x318] sm:$0xff]
    %v183 = vld [vmem:[#allocation5 + $0x320] sm:$0xff]
    %v184 = vld [vmem:[#allocation5 + $0x328] sm:$0xff]
    %v185 = vld [vmem:[#allocation5 + $0x330] sm:$0xff]
    %v186 = vld [vmem:[#allocation5 + $0x338] sm:$0xff]
    %v187 = vld [vmem:[#allocation5 + $0x340] sm:$0xff]
    %v188 = vld [vmem:[#allocation5 + $0x348] sm:$0xff]
    %v189 = vld [vmem:[#allocation5 + $0x350] sm:$0xff]
    %v190 = vld [vmem:[#allocation5 + $0x358] sm:$0xff]
    %v191 = vld [vmem:[#allocation5 + $0x360] sm:$0xff]
    %v192 = vld [vmem:[#allocation5 + $0x368] sm:$0xff]
    %v193 = vld [vmem:[#allocation5 + $0x370] sm:$0xff]
    %v194 = vld [vmem:[#allocation5 + $0x378] sm:$0xff]
    %v195 = vld [vmem:[#allocation5 + $0x380] sm:$0xff]
    %v196 = vld [vmem:[#allocation5 + $0x388] sm:$0xff]
    %v197 = vld [vmem:[#allocation5 + $0x390] sm:$0xff]
    %v198 = vld [vmem:[#allocation5 + $0x398] sm:$0xff]
    %v199 = vld [vmem:[#allocation5 + $0x3a0] sm:$0xff]
    %v200 = vld [vmem:[#allocation5 + $0x3a8] sm:$0xff]
    %v201 = vld [vmem:[#allocation5 + $0x3b0] sm:$0xff]
    %v202 = vld [vmem:[#allocation5 + $0x3b8] sm:$0xff]
    %v203 = vld [vmem:[#allocation5 + $0x3c0] sm:$0xff]
    %v204 = vld [vmem:[#allocation5 + $0x3c8] sm:$0xff]
    %v205 = vld [vmem:[#allocation5 + $0x3d0] sm:$0xff]
    %v206 = vld [vmem:[#allocation5 + $0x3d8] sm:$0xff]
    %v207 = vld [vmem:[#allocation5 + $0x3e0] sm:$0xff]
    %v208 = vld [vmem:[#allocation5 + $0x3e8] sm:$0xff]
    %v209 = vld [vmem:[#allocation5 + $0x3f0] sm:$0xff]
    %v210 = vld [vmem:[#allocation5 + $0x3f8] sm:$0xff]
    %v211 = vld [vmem:[#allocation7] sm:$0xff]
    %v212 = vld [vmem:[#allocation7 + $0x8] sm:$0xff]
    %v213 = vld [vmem:[#allocation7 + $0x10] sm:$0xff]
    %v214 = vld [vmem:[#allocation7 + $0x18] sm:$0xff]
    %v215 = vld [vmem:[#allocation7 + $0x20] sm:$0xff]
    %v216 = vld [vmem:[#allocation7 + $0x28] sm:$0xff]
    %v217 = vld [vmem:[#allocation7 + $0x30] sm:$0xff]
    %v218 = vld [vmem:[#allocation7 + $0x38] sm:$0xff]
    %v227 = vperm.slane %v211, 0
    %v228 = vperm.slane %v211, 1
    %v229 = vperm.slane %v211, 2
    %v230 = vperm.slane %v211, 3
    %v231 = vperm.slane %v211, 4
    %v232 = vperm.slane %v211, 5
    %v233 = vperm.slane %v211, 6
    %v234 = vperm.slane %v211, 7
    %v235 = vperm.slane %v212, 0
    %v236 = vperm.slane %v212, 1
    %v237 = vperm.slane %v212, 2
    %v238 = vperm.slane %v212, 3
    %v239 = vperm.slane %v212, 4
    %v240 = vperm.slane %v212, 5
    %v241 = vperm.slane %v212, 6
    %v242 = vperm.slane %v212, 7
    %v243 = vperm.slane %v213, 0
    %v244 = vperm.slane %v213, 1
    %v245 = vperm.slane %v213, 2
    %v246 = vperm.slane %v213, 3
    %v247 = vperm.slane %v213, 4
    %v248 = vperm.slane %v213, 5
    %v249 = vperm.slane %v213, 6
    %v250 = vperm.slane %v213, 7
    %v251 = vperm.slane %v214, 0
    %v252 = vperm.slane %v214, 1
    %v253 = vperm.slane %v214, 2
    %v254 = vperm.slane %v214, 3
    %v255 = vperm.slane %v214, 4
    %v256 = vperm.slane %v214, 5
    %v257 = vperm.slane %v214, 6
    %v258 = vperm.slane %v214, 7
    %v259 = vperm.slane %v215, 0
    %v260 = vperm.slane %v215, 1
    %v261 = vperm.slane %v215, 2
    %v262 = vperm.slane %v215, 3
    %v263 = vperm.slane %v215, 4
    %v264 = vperm.slane %v215, 5
    %v265 = vperm.slane %v215, 6
    %v266 = vperm.slane %v215, 7
    %v267 = vperm.slane %v216, 0
    %v268 = vperm.slane %v216, 1
    %v269 = vperm.slane %v216, 2
    %v270 = vperm.slane %v216, 3
    %v271 = vperm.slane %v216, 4
    %v272 = vperm.slane %v216, 5
    %v273 = vperm.slane %v216, 6
    %v274 = vperm.slane %v216, 7
    %v275 = vperm.slane %v217, 0
    %v276 = vperm.slane %v217, 1
    %v277 = vperm.slane %v217, 2
    %v278 = vperm.slane %v217, 3
    %v279 = vperm.slane %v217, 4
    %v280 = vperm.slane %v217, 5
    %v281 = vperm.slane %v217, 6
    %v282 = vperm.slane %v217, 7
    %v283 = vperm.slane %v218, 0
    %v284 = vperm.slane %v218, 1
    %v285 = vperm.slane %v218, 2
    %v286 = vperm.slane %v218, 3
    %v287 = vperm.slane %v218, 4
    %v288 = vperm.slane %v218, 5
    %v289 = vperm.slane %v218, 6
    %v290 = vperm.slane %v218, 7
    %v483 = vunpack.c.l.b16 %v83
    %v484 = vunpack.c.h.b16 %v83
    %v485 = vunpack.c.l.b16 %v84
    %v486 = vunpack.c.h.b16 %v84
    %v487 = vunpack.c.l.b16 %v85
    %v488 = vunpack.c.h.b16 %v85
    %v489 = vunpack.c.l.b16 %v86
    %v490 = vunpack.c.h.b16 %v86
    %v491 = vunpack.c.l.b16 %v87
    %v492 = vunpack.c.h.b16 %v87
    %v493 = vunpack.c.l.b16 %v88
    %v494 = vunpack.c.h.b16 %v88
    %v495 = vunpack.c.l.b16 %v89
    %v496 = vunpack.c.h.b16 %v89
    %v497 = vunpack.c.l.b16 %v90
    %v498 = vunpack.c.h.b16 %v90
    %v499 = vunpack.c.l.b16 %v91
    %v500 = vunpack.c.h.b16 %v91
    %v501 = vunpack.c.l.b16 %v92
    %v502 = vunpack.c.h.b16 %v92
    %v503 = vunpack.c.l.b16 %v93
    %v504 = vunpack.c.h.b16 %v93
    %v505 = vunpack.c.l.b16 %v94
    %v506 = vunpack.c.h.b16 %v94
    %v507 = vunpack.c.l.b16 %v95
    %v508 = vunpack.c.h.b16 %v95
    %v509 = vunpack.c.l.b16 %v96
    %v510 = vunpack.c.h.b16 %v96
    %v511 = vunpack.c.l.b16 %v97
    %v512 = vunpack.c.h.b16 %v97
    %v513 = vunpack.c.l.b16 %v98
    %v514 = vunpack.c.h.b16 %v98
    %v515 = vunpack.c.l.b16 %v99
    %v516 = vunpack.c.h.b16 %v99
    %v517 = vunpack.c.l.b16 %v100
    %v518 = vunpack.c.h.b16 %v100
    %v519 = vunpack.c.l.b16 %v101
    %v520 = vunpack.c.h.b16 %v101
    %v521 = vunpack.c.l.b16 %v102
    %v522 = vunpack.c.h.b16 %v102
    %v523 = vunpack.c.l.b16 %v103
    %v524 = vunpack.c.h.b16 %v103
    %v525 = vunpack.c.l.b16 %v104
    %v526 = vunpack.c.h.b16 %v104
    %v527 = vunpack.c.l.b16 %v105
    %v528 = vunpack.c.h.b16 %v105
    %v529 = vunpack.c.l.b16 %v106
    %v530 = vunpack.c.h.b16 %v106
    %v531 = vunpack.c.l.b16 %v107
    %v532 = vunpack.c.h.b16 %v107
    %v533 = vunpack.c.l.b16 %v108
    %v534 = vunpack.c.h.b16 %v108
    %v535 = vunpack.c.l.b16 %v109
    %v536 = vunpack.c.h.b16 %v109
    %v537 = vunpack.c.l.b16 %v110
    %v538 = vunpack.c.h.b16 %v110
    %v539 = vunpack.c.l.b16 %v111
    %v540 = vunpack.c.h.b16 %v111
    %v541 = vunpack.c.l.b16 %v112
    %v542 = vunpack.c.h.b16 %v112
    %v543 = vunpack.c.l.b16 %v113
    %v544 = vunpack.c.h.b16 %v113
    %v545 = vunpack.c.l.b16 %v114
    %v546 = vunpack.c.h.b16 %v114
    %v547 = vunpack.c.l.b16 %v115
    %v548 = vunpack.c.h.b16 %v115
    %v549 = vunpack.c.l.b16 %v116
    %v550 = vunpack.c.h.b16 %v116
    %v551 = vunpack.c.l.b16 %v117
    %v552 = vunpack.c.h.b16 %v117
    %v553 = vunpack.c.l.b16 %v118
    %v554 = vunpack.c.h.b16 %v118
    %v555 = vunpack.c.l.b16 %v119
    %v556 = vunpack.c.h.b16 %v119
    %v557 = vunpack.c.l.b16 %v120
    %v558 = vunpack.c.h.b16 %v120
    %v559 = vunpack.c.l.b16 %v121
    %v560 = vunpack.c.h.b16 %v121
    %v561 = vunpack.c.l.b16 %v122
    %v562 = vunpack.c.h.b16 %v122
    %v563 = vunpack.c.l.b16 %v123
    %v564 = vunpack.c.h.b16 %v123
    %v565 = vunpack.c.l.b16 %v124
    %v566 = vunpack.c.h.b16 %v124
    %v567 = vunpack.c.l.b16 %v125
    %v568 = vunpack.c.h.b16 %v125
    %v569 = vunpack.c.l.b16 %v126
    %v570 = vunpack.c.h.b16 %v126
    %v571 = vunpack.c.l.b16 %v127
    %v572 = vunpack.c.h.b16 %v127
    %v573 = vunpack.c.l.b16 %v128
    %v574 = vunpack.c.h.b16 %v128
    %v575 = vunpack.c.l.b16 %v129
    %v576 = vunpack.c.h.b16 %v129
    %v577 = vunpack.c.l.b16 %v130
    %v578 = vunpack.c.h.b16 %v130
    %v579 = vunpack.c.l.b16 %v131
    %v580 = vunpack.c.h.b16 %v131
    %v581 = vunpack.c.l.b16 %v132
    %v582 = vunpack.c.h.b16 %v132
    %v583 = vunpack.c.l.b16 %v133
    %v584 = vunpack.c.h.b16 %v133
    %v585 = vunpack.c.l.b16 %v134
    %v586 = vunpack.c.h.b16 %v134
    %v587 = vunpack.c.l.b16 %v135
    %v588 = vunpack.c.h.b16 %v135
    %v589 = vunpack.c.l.b16 %v136
    %v590 = vunpack.c.h.b16 %v136
    %v591 = vunpack.c.l.b16 %v137
    %v592 = vunpack.c.h.b16 %v137
    %v593 = vunpack.c.l.b16 %v138
    %v594 = vunpack.c.h.b16 %v138
    %v595 = vunpack.c.l.b16 %v139
    %v596 = vunpack.c.h.b16 %v139
    %v597 = vunpack.c.l.b16 %v140
    %v598 = vunpack.c.h.b16 %v140
    %v599 = vunpack.c.l.b16 %v141
    %v600 = vunpack.c.h.b16 %v141
    %v601 = vunpack.c.l.b16 %v142
    %v602 = vunpack.c.h.b16 %v142
    %v603 = vunpack.c.l.b16 %v143
    %v604 = vunpack.c.h.b16 %v143
    %v605 = vunpack.c.l.b16 %v144
    %v606 = vunpack.c.h.b16 %v144
    %v607 = vunpack.c.l.b16 %v145
    %v608 = vunpack.c.h.b16 %v145
    %v609 = vunpack.c.l.b16 %v146
    %v610 = vunpack.c.h.b16 %v146
    %v611 = vunpack.c.l.b16 %v147
    %v612 = vunpack.c.h.b16 %v147
    %v613 = vunpack.c.l.b16 %v148
    %v614 = vunpack.c.h.b16 %v148
    %v615 = vunpack.c.l.b16 %v149
    %v616 = vunpack.c.h.b16 %v149
    %v617 = vunpack.c.l.b16 %v150
    %v618 = vunpack.c.h.b16 %v150
    %v619 = vunpack.c.l.b16 %v151
    %v620 = vunpack.c.h.b16 %v151
    %v621 = vunpack.c.l.b16 %v152
    %v622 = vunpack.c.h.b16 %v152
    %v623 = vunpack.c.l.b16 %v153
    %v624 = vunpack.c.h.b16 %v153
    %v625 = vunpack.c.l.b16 %v154
    %v626 = vunpack.c.h.b16 %v154
    %v627 = vunpack.c.l.b16 %v155
    %v628 = vunpack.c.h.b16 %v155
    %v629 = vunpack.c.l.b16 %v156
    %v630 = vunpack.c.h.b16 %v156
    %v631 = vunpack.c.l.b16 %v157
    %v632 = vunpack.c.h.b16 %v157
    %v633 = vunpack.c.l.b16 %v158
    %v634 = vunpack.c.h.b16 %v158
    %v635 = vunpack.c.l.b16 %v159
    %v636 = vunpack.c.h.b16 %v159
    %v637 = vunpack.c.l.b16 %v160
    %v638 = vunpack.c.h.b16 %v160
    %v639 = vunpack.c.l.b16 %v161
    %v640 = vunpack.c.h.b16 %v161
    %v641 = vunpack.c.l.b16 %v162
    %v642 = vunpack.c.h.b16 %v162
    %v643 = vunpack.c.l.b16 %v163
    %v644 = vunpack.c.h.b16 %v163
    %v645 = vunpack.c.l.b16 %v164
    %v646 = vunpack.c.h.b16 %v164
    %v647 = vunpack.c.l.b16 %v165
    %v648 = vunpack.c.h.b16 %v165
    %v649 = vunpack.c.l.b16 %v166
    %v650 = vunpack.c.h.b16 %v166
    %v651 = vunpack.c.l.b16 %v167
    %v652 = vunpack.c.h.b16 %v167
    %v653 = vunpack.c.l.b16 %v168
    %v654 = vunpack.c.h.b16 %v168
    %v655 = vunpack.c.l.b16 %v169
    %v656 = vunpack.c.h.b16 %v169
    %v657 = vunpack.c.l.b16 %v170
    %v658 = vunpack.c.h.b16 %v170
    %v659 = vunpack.c.l.b16 %v171
    %v660 = vunpack.c.h.b16 %v171
    %v661 = vunpack.c.l.b16 %v172
    %v662 = vunpack.c.h.b16 %v172
    %v663 = vunpack.c.l.b16 %v173
    %v664 = vunpack.c.h.b16 %v173
    %v665 = vunpack.c.l.b16 %v174
    %v666 = vunpack.c.h.b16 %v174
    %v667 = vunpack.c.l.b16 %v175
    %v668 = vunpack.c.h.b16 %v175
    %v669 = vunpack.c.l.b16 %v176
    %v670 = vunpack.c.h.b16 %v176
    %v671 = vunpack.c.l.b16 %v177
    %v672 = vunpack.c.h.b16 %v177
    %v673 = vunpack.c.l.b16 %v178
    %v674 = vunpack.c.h.b16 %v178
    %v675 = vunpack.c.l.b16 %v179
    %v676 = vunpack.c.h.b16 %v179
    %v677 = vunpack.c.l.b16 %v180
    %v678 = vunpack.c.h.b16 %v180
    %v679 = vunpack.c.l.b16 %v181
    %v680 = vunpack.c.h.b16 %v181
    %v681 = vunpack.c.l.b16 %v182
    %v682 = vunpack.c.h.b16 %v182
    %v683 = vunpack.c.l.b16 %v183
    %v684 = vunpack.c.h.b16 %v183
    %v685 = vunpack.c.l.b16 %v184
    %v686 = vunpack.c.h.b16 %v184
    %v687 = vunpack.c.l.b16 %v185
    %v688 = vunpack.c.h.b16 %v185
    %v689 = vunpack.c.l.b16 %v186
    %v690 = vunpack.c.h.b16 %v186
    %v691 = vunpack.c.l.b16 %v187
    %v692 = vunpack.c.h.b16 %v187
    %v693 = vunpack.c.l.b16 %v188
    %v694 = vunpack.c.h.b16 %v188
    %v695 = vunpack.c.l.b16 %v189
    %v696 = vunpack.c.h.b16 %v189
    %v697 = vunpack.c.l.b16 %v190
    %v698 = vunpack.c.h.b16 %v190
    %v699 = vunpack.c.l.b16 %v191
    %v700 = vunpack.c.h.b16 %v191
    %v701 = vunpack.c.l.b16 %v192
    %v702 = vunpack.c.h.b16 %v192
    %v703 = vunpack.c.l.b16 %v193
    %v704 = vunpack.c.h.b16 %v193
    %v705 = vunpack.c.l.b16 %v194
    %v706 = vunpack.c.h.b16 %v194
    %v707 = vunpack.c.l.b16 %v195
    %v708 = vunpack.c.h.b16 %v195
    %v709 = vunpack.c.l.b16 %v196
    %v710 = vunpack.c.h.b16 %v196
    %v711 = vunpack.c.l.b16 %v197
    %v712 = vunpack.c.h.b16 %v197
    %v713 = vunpack.c.l.b16 %v198
    %v714 = vunpack.c.h.b16 %v198
    %v715 = vunpack.c.l.b16 %v199
    %v716 = vunpack.c.h.b16 %v199
    %v717 = vunpack.c.l.b16 %v200
    %v718 = vunpack.c.h.b16 %v200
    %v719 = vunpack.c.l.b16 %v201
    %v720 = vunpack.c.h.b16 %v201
    %v721 = vunpack.c.l.b16 %v202
    %v722 = vunpack.c.h.b16 %v202
    %v723 = vunpack.c.l.b16 %v203
    %v724 = vunpack.c.h.b16 %v203
    %v725 = vunpack.c.l.b16 %v204
    %v726 = vunpack.c.h.b16 %v204
    %v727 = vunpack.c.l.b16 %v205
    %v728 = vunpack.c.h.b16 %v205
    %v729 = vunpack.c.l.b16 %v206
    %v730 = vunpack.c.h.b16 %v206
    %v731 = vunpack.c.l.b16 %v207
    %v732 = vunpack.c.h.b16 %v207
    %v733 = vunpack.c.l.b16 %v208
    %v734 = vunpack.c.h.b16 %v208
    %v735 = vunpack.c.l.b16 %v209
    %v736 = vunpack.c.h.b16 %v209
    %v737 = vunpack.c.l.b16 %v210
    %v738 = vunpack.c.h.b16 %v210
    %v739 = vpack.c.b16 %v547, %v483
    %v740 = vpack.c.b16 %v548, %v484
    %v741 = vpack.c.b16 %v549, %v485
    %v742 = vpack.c.b16 %v550, %v486
    %v743 = vpack.c.b16 %v551, %v487
    %v744 = vpack.c.b16 %v552, %v488
    %v745 = vpack.c.b16 %v553, %v489
    %v746 = vpack.c.b16 %v554, %v490
    %v747 = vpack.c.b16 %v555, %v491
    %v748 = vpack.c.b16 %v556, %v492
    %v749 = vpack.c.b16 %v557, %v493
    %v750 = vpack.c.b16 %v558, %v494
    %v751 = vpack.c.b16 %v559, %v495
    %v752 = vpack.c.b16 %v560, %v496
    %v753 = vpack.c.b16 %v561, %v497
    %v754 = vpack.c.b16 %v562, %v498
    %v755 = vpack.c.b16 %v563, %v499
    %v756 = vpack.c.b16 %v564, %v500
    %v757 = vpack.c.b16 %v565, %v501
    %v758 = vpack.c.b16 %v566, %v502
    %v759 = vpack.c.b16 %v567, %v503
    %v760 = vpack.c.b16 %v568, %v504
    %v761 = vpack.c.b16 %v569, %v505
    %v762 = vpack.c.b16 %v570, %v506
    %v763 = vpack.c.b16 %v571, %v507
    %v764 = vpack.c.b16 %v572, %v508
    %v765 = vpack.c.b16 %v573, %v509
    %v766 = vpack.c.b16 %v574, %v510
    %v767 = vpack.c.b16 %v575, %v511
    %v768 = vpack.c.b16 %v576, %v512
    %v769 = vpack.c.b16 %v577, %v513
    %v770 = vpack.c.b16 %v578, %v514
    %v771 = vpack.c.b16 %v579, %v515
    %v772 = vpack.c.b16 %v580, %v516
    %v773 = vpack.c.b16 %v581, %v517
    %v774 = vpack.c.b16 %v582, %v518
    %v775 = vpack.c.b16 %v583, %v519
    %v776 = vpack.c.b16 %v584, %v520
    %v777 = vpack.c.b16 %v585, %v521
    %v778 = vpack.c.b16 %v586, %v522
    %v779 = vpack.c.b16 %v587, %v523
    %v780 = vpack.c.b16 %v588, %v524
    %v781 = vpack.c.b16 %v589, %v525
    %v782 = vpack.c.b16 %v590, %v526
    %v783 = vpack.c.b16 %v591, %v527
    %v784 = vpack.c.b16 %v592, %v528
    %v785 = vpack.c.b16 %v593, %v529
    %v786 = vpack.c.b16 %v594, %v530
    %v787 = vpack.c.b16 %v595, %v531
    %v788 = vpack.c.b16 %v596, %v532
    %v789 = vpack.c.b16 %v597, %v533
    %v790 = vpack.c.b16 %v598, %v534
    %v791 = vpack.c.b16 %v599, %v535
    %v792 = vpack.c.b16 %v600, %v536
    %v793 = vpack.c.b16 %v601, %v537
    %v794 = vpack.c.b16 %v602, %v538
    %v795 = vpack.c.b16 %v603, %v539
    %v796 = vpack.c.b16 %v604, %v540
    %v797 = vpack.c.b16 %v605, %v541
    %v798 = vpack.c.b16 %v606, %v542
    %v799 = vpack.c.b16 %v607, %v543
    %v800 = vpack.c.b16 %v608, %v544
    %v801 = vpack.c.b16 %v609, %v545
    %v802 = vpack.c.b16 %v610, %v546
    %v803 = vpack.c.b16 %v675, %v611
    %v804 = vpack.c.b16 %v676, %v612
    %v805 = vpack.c.b16 %v677, %v613
    %v806 = vpack.c.b16 %v678, %v614
    %v807 = vpack.c.b16 %v679, %v615
    %v808 = vpack.c.b16 %v680, %v616
    %v809 = vpack.c.b16 %v681, %v617
    %v810 = vpack.c.b16 %v682, %v618
    %v811 = vpack.c.b16 %v683, %v619
    %v812 = vpack.c.b16 %v684, %v620
    %v813 = vpack.c.b16 %v685, %v621
    %v814 = vpack.c.b16 %v686, %v622
    %v815 = vpack.c.b16 %v687, %v623
    %v816 = vpack.c.b16 %v688, %v624
    %v817 = vpack.c.b16 %v689, %v625
    %v818 = vpack.c.b16 %v690, %v626
    %v819 = vpack.c.b16 %v691, %v627
    %v820 = vpack.c.b16 %v692, %v628
    %v821 = vpack.c.b16 %v693, %v629
    %v822 = vpack.c.b16 %v694, %v630
    %v823 = vpack.c.b16 %v695, %v631
    %v824 = vpack.c.b16 %v696, %v632
    %v825 = vpack.c.b16 %v697, %v633
    %v826 = vpack.c.b16 %v698, %v634
    %v827 = vpack.c.b16 %v699, %v635
    %v828 = vpack.c.b16 %v700, %v636
    %v829 = vpack.c.b16 %v701, %v637
    %v830 = vpack.c.b16 %v702, %v638
    %v831 = vpack.c.b16 %v703, %v639
    %v832 = vpack.c.b16 %v704, %v640
    %v833 = vpack.c.b16 %v705, %v641
    %v834 = vpack.c.b16 %v706, %v642
    %v835 = vpack.c.b16 %v707, %v643
    %v836 = vpack.c.b16 %v708, %v644
    %v837 = vpack.c.b16 %v709, %v645
    %v838 = vpack.c.b16 %v710, %v646
    %v839 = vpack.c.b16 %v711, %v647
    %v840 = vpack.c.b16 %v712, %v648
    %v841 = vpack.c.b16 %v713, %v649
    %v842 = vpack.c.b16 %v714, %v650
    %v843 = vpack.c.b16 %v715, %v651
    %v844 = vpack.c.b16 %v716, %v652
    %v845 = vpack.c.b16 %v717, %v653
    %v846 = vpack.c.b16 %v718, %v654
    %v847 = vpack.c.b16 %v719, %v655
    %v848 = vpack.c.b16 %v720, %v656
    %v849 = vpack.c.b16 %v721, %v657
    %v850 = vpack.c.b16 %v722, %v658
    %v851 = vpack.c.b16 %v723, %v659
    %v852 = vpack.c.b16 %v724, %v660
    %v853 = vpack.c.b16 %v725, %v661
    %v854 = vpack.c.b16 %v726, %v662
    %v855 = vpack.c.b16 %v727, %v663
    %v856 = vpack.c.b16 %v728, %v664
    %v857 = vpack.c.b16 %v729, %v665
    %v858 = vpack.c.b16 %v730, %v666
    %v859 = vpack.c.b16 %v731, %v667
    %v860 = vpack.c.b16 %v732, %v668
    %v861 = vpack.c.b16 %v733, %v669
    %v862 = vpack.c.b16 %v734, %v670
    %v863 = vpack.c.b16 %v735, %v671
    %v864 = vpack.c.b16 %v736, %v672
    %v865 = vpack.c.b16 %v737, %v673
    %v866 = vpack.c.b16 %v738, %v674
    %vm995 = vcmask 261120
    %v997 = vsel %vm995, %v82, 0
    %999 = vmatpush.bf16.msra.mxu0 0
    %1000 = vmatpush.bf16.msra.mxu0 0
    %1001 = vmatpush.bf16.msra.mxu0 0
    %1002 = vmatpush.bf16.msra.mxu0 0
    %1003 = vmatpush.bf16.msra.mxu0 0
    %1004 = vmatpush.bf16.msra.mxu0 0
    %1005 = vmatpush.bf16.msra.mxu0 %v803
    %1006 = vmatpush.bf16.msra.mxu0 %v739
    %1007 = vmatmul.bf16.gmra.mxu0 %v997
    %v1008 = vpop.f32.mrf.mxu0
    %v1009 = vadd.f32 %v227, %v1008
    %v1010 = vpop.f32.mrf.mxu0
    %1011 = vdwg.mxu0
    %1012 = vmatpush.bf16.msra.mxu0 0
    %1013 = vmatpush.bf16.msra.mxu0 0
    %1014 = vmatpush.bf16.msra.mxu0 0
    %1015 = vmatpush.bf16.msra.mxu0 0
    %1016 = vmatpush.bf16.msra.mxu0 0
    %1017 = vmatpush.bf16.msra.mxu0 0
    %1018 = vmatpush.bf16.msra.mxu0 %v804
    %1019 = vmatpush.bf16.msra.mxu0 %v740
    %1020 = vmatmul.bf16.gmra.mxu0 %v997
    %v1021 = vpop.f32.mrf.mxu0
    %v1022 = vadd.f32 %v228, %v1021
    %v1023 = vpop.f32.mrf.mxu0
    %1024 = vdwg.mxu0
    %1025 = vmatpush.bf16.msra.mxu0 0
    %1026 = vmatpush.bf16.msra.mxu0 0
    %1027 = vmatpush.bf16.msra.mxu0 0
    %1028 = vmatpush.bf16.msra.mxu0 0
    %1029 = vmatpush.bf16.msra.mxu0 0
    %1030 = vmatpush.bf16.msra.mxu0 0
    %1031 = vmatpush.bf16.msra.mxu0 %v805
    %1032 = vmatpush.bf16.msra.mxu0 %v741
    %1033 = vmatmul.bf16.gmra.mxu0 %v997
    %v1034 = vpop.f32.mrf.mxu0
    %v1035 = vadd.f32 %v229, %v1034
    %v1036 = vpop.f32.mrf.mxu0
    %1037 = vdwg.mxu0
    %1038 = vmatpush.bf16.msra.mxu0 0
    %1039 = vmatpush.bf16.msra.mxu0 0
    %1040 = vmatpush.bf16.msra.mxu0 0
    %1041 = vmatpush.bf16.msra.mxu0 0
    %1042 = vmatpush.bf16.msra.mxu0 0
    %1043 = vmatpush.bf16.msra.mxu0 0
    %1044 = vmatpush.bf16.msra.mxu0 %v806
    %1045 = vmatpush.bf16.msra.mxu0 %v742
    %1046 = vmatmul.bf16.gmra.mxu0 %v997
    %v1047 = vpop.f32.mrf.mxu0
    %v1048 = vadd.f32 %v230, %v1047
    %v1049 = vpop.f32.mrf.mxu0
    %1050 = vdwg.mxu0
    %1051 = vmatpush.bf16.msra.mxu0 0
    %1052 = vmatpush.bf16.msra.mxu0 0
    %1053 = vmatpush.bf16.msra.mxu0 0
    %1054 = vmatpush.bf16.msra.mxu0 0
    %1055 = vmatpush.bf16.msra.mxu0 0
    %1056 = vmatpush.bf16.msra.mxu0 0
    %1057 = vmatpush.bf16.msra.mxu0 %v807
    %1058 = vmatpush.bf16.msra.mxu0 %v743
    %1059 = vmatmul.bf16.gmra.mxu0 %v997
    %v1060 = vpop.f32.mrf.mxu0
    %v1061 = vadd.f32 %v231, %v1060
    %v1062 = vpop.f32.mrf.mxu0
    %1063 = vdwg.mxu0
    %1064 = vmatpush.bf16.msra.mxu0 0
    %1065 = vmatpush.bf16.msra.mxu0 0
    %1066 = vmatpush.bf16.msra.mxu0 0
    %1067 = vmatpush.bf16.msra.mxu0 0
    %1068 = vmatpush.bf16.msra.mxu0 0
    %1069 = vmatpush.bf16.msra.mxu0 0
    %1070 = vmatpush.bf16.msra.mxu0 %v808
    %1071 = vmatpush.bf16.msra.mxu0 %v744
    %1072 = vmatmul.bf16.gmra.mxu0 %v997
    %v1073 = vpop.f32.mrf.mxu0
    %v1074 = vadd.f32 %v232, %v1073
    %v1075 = vpop.f32.mrf.mxu0
    %1076 = vdwg.mxu0
    %1077 = vmatpush.bf16.msra.mxu0 0
    %1078 = vmatpush.bf16.msra.mxu0 0
    %1079 = vmatpush.bf16.msra.mxu0 0
    %1080 = vmatpush.bf16.msra.mxu0 0
    %1081 = vmatpush.bf16.msra.mxu0 0
    %1082 = vmatpush.bf16.msra.mxu0 0
    %1083 = vmatpush.bf16.msra.mxu0 %v809
    %1084 = vmatpush.bf16.msra.mxu0 %v745
    %1085 = vmatmul.bf16.gmra.mxu0 %v997
    %v1086 = vpop.f32.mrf.mxu0
    %v1087 = vadd.f32 %v233, %v1086
    %v1088 = vpop.f32.mrf.mxu0
    %1089 = vdwg.mxu0
    %1090 = vmatpush.bf16.msra.mxu0 0
    %1091 = vmatpush.bf16.msra.mxu0 0
    %1092 = vmatpush.bf16.msra.mxu0 0
    %1093 = vmatpush.bf16.msra.mxu0 0
    %1094 = vmatpush.bf16.msra.mxu0 0
    %1095 = vmatpush.bf16.msra.mxu0 0
    %1096 = vmatpush.bf16.msra.mxu0 %v810
    %1097 = vmatpush.bf16.msra.mxu0 %v746
    %1098 = vmatmul.bf16.gmra.mxu0 %v997
    %v1099 = vpop.f32.mrf.mxu0
    %v1100 = vadd.f32 %v234, %v1099
    %v1101 = vpop.f32.mrf.mxu0
    %1102 = vdwg.mxu0
    %1103 = vmatpush.bf16.msra.mxu0 0
    %1104 = vmatpush.bf16.msra.mxu0 0
    %1105 = vmatpush.bf16.msra.mxu0 0
    %1106 = vmatpush.bf16.msra.mxu0 0
    %1107 = vmatpush.bf16.msra.mxu0 0
    %1108 = vmatpush.bf16.msra.mxu0 0
    %1109 = vmatpush.bf16.msra.mxu0 %v811
    %1110 = vmatpush.bf16.msra.mxu0 %v747
    %1111 = vmatmul.bf16.gmra.mxu0 %v997
    %v1112 = vpop.f32.mrf.mxu0
    %v1113 = vadd.f32 %v235, %v1112
    %v1114 = vpop.f32.mrf.mxu0
    %1115 = vdwg.mxu0
    %1116 = vmatpush.bf16.msra.mxu0 0
    %1117 = vmatpush.bf16.msra.mxu0 0
    %1118 = vmatpush.bf16.msra.mxu0 0
    %1119 = vmatpush.bf16.msra.mxu0 0
    %1120 = vmatpush.bf16.msra.mxu0 0
    %1121 = vmatpush.bf16.msra.mxu0 0
    %1122 = vmatpush.bf16.msra.mxu0 %v812
    %1123 = vmatpush.bf16.msra.mxu0 %v748
    %1124 = vmatmul.bf16.gmra.mxu0 %v997
    %v1125 = vpop.f32.mrf.mxu0
    %v1126 = vadd.f32 %v236, %v1125
    %v1127 = vpop.f32.mrf.mxu0
    %1128 = vdwg.mxu0
    %1129 = vmatpush.bf16.msra.mxu0 0
    %1130 = vmatpush.bf16.msra.mxu0 0
    %1131 = vmatpush.bf16.msra.mxu0 0
    %1132 = vmatpush.bf16.msra.mxu0 0
    %1133 = vmatpush.bf16.msra.mxu0 0
    %1134 = vmatpush.bf16.msra.mxu0 0
    %1135 = vmatpush.bf16.msra.mxu0 %v813
    %1136 = vmatpush.bf16.msra.mxu0 %v749
    %1137 = vmatmul.bf16.gmra.mxu0 %v997
    %v1138 = vpop.f32.mrf.mxu0
    %v1139 = vadd.f32 %v237, %v1138
    %v1140 = vpop.f32.mrf.mxu0
    %1141 = vdwg.mxu0
    %1142 = vmatpush.bf16.msra.mxu0 0
    %1143 = vmatpush.bf16.msra.mxu0 0
    %1144 = vmatpush.bf16.msra.mxu0 0
    %1145 = vmatpush.bf16.msra.mxu0 0
    %1146 = vmatpush.bf16.msra.mxu0 0
    %1147 = vmatpush.bf16.msra.mxu0 0
    %1148 = vmatpush.bf16.msra.mxu0 %v814
    %1149 = vmatpush.bf16.msra.mxu0 %v750
    %1150 = vmatmul.bf16.gmra.mxu0 %v997
    %v1151 = vpop.f32.mrf.mxu0
    %v1152 = vadd.f32 %v238, %v1151
    %v1153 = vpop.f32.mrf.mxu0
    %1154 = vdwg.mxu0
    %1155 = vmatpush.bf16.msra.mxu0 0
    %1156 = vmatpush.bf16.msra.mxu0 0
    %1157 = vmatpush.bf16.msra.mxu0 0
    %1158 = vmatpush.bf16.msra.mxu0 0
    %1159 = vmatpush.bf16.msra.mxu0 0
    %1160 = vmatpush.bf16.msra.mxu0 0
    %1161 = vmatpush.bf16.msra.mxu0 %v815
    %1162 = vmatpush.bf16.msra.mxu0 %v751
    %1163 = vmatmul.bf16.gmra.mxu0 %v997
    %v1164 = vpop.f32.mrf.mxu0
    %v1165 = vadd.f32 %v239, %v1164
    %v1166 = vpop.f32.mrf.mxu0
    %1167 = vdwg.mxu0
    %1168 = vmatpush.bf16.msra.mxu0 0
    %1169 = vmatpush.bf16.msra.mxu0 0
    %1170 = vmatpush.bf16.msra.mxu0 0
    %1171 = vmatpush.bf16.msra.mxu0 0
    %1172 = vmatpush.bf16.msra.mxu0 0
    %1173 = vmatpush.bf16.msra.mxu0 0
    %1174 = vmatpush.bf16.msra.mxu0 %v816
    %1175 = vmatpush.bf16.msra.mxu0 %v752
    %1176 = vmatmul.bf16.gmra.mxu0 %v997
    %v1177 = vpop.f32.mrf.mxu0
    %v1178 = vadd.f32 %v240, %v1177
    %v1179 = vpop.f32.mrf.mxu0
    %1180 = vdwg.mxu0
    %1181 = vmatpush.bf16.msra.mxu0 0
    %1182 = vmatpush.bf16.msra.mxu0 0
    %1183 = vmatpush.bf16.msra.mxu0 0
    %1184 = vmatpush.bf16.msra.mxu0 0
    %1185 = vmatpush.bf16.msra.mxu0 0
    %1186 = vmatpush.bf16.msra.mxu0 0
    %1187 = vmatpush.bf16.msra.mxu0 %v817
    %1188 = vmatpush.bf16.msra.mxu0 %v753
    %1189 = vmatmul.bf16.gmra.mxu0 %v997
    %v1190 = vpop.f32.mrf.mxu0
    %v1191 = vadd.f32 %v241, %v1190
    %v1192 = vpop.f32.mrf.mxu0
    %1193 = vdwg.mxu0
    %1194 = vmatpush.bf16.msra.mxu0 0
    %1195 = vmatpush.bf16.msra.mxu0 0
    %1196 = vmatpush.bf16.msra.mxu0 0
    %1197 = vmatpush.bf16.msra.mxu0 0
    %1198 = vmatpush.bf16.msra.mxu0 0
    %1199 = vmatpush.bf16.msra.mxu0 0
    %1200 = vmatpush.bf16.msra.mxu0 %v818
    %1201 = vmatpush.bf16.msra.mxu0 %v754
    %1202 = vmatmul.bf16.gmra.mxu0 %v997
    %v1203 = vpop.f32.mrf.mxu0
    %v1204 = vadd.f32 %v242, %v1203
    %v1205 = vpop.f32.mrf.mxu0
    %1206 = vdwg.mxu0
    %1207 = vmatpush.bf16.msra.mxu0 0
    %1208 = vmatpush.bf16.msra.mxu0 0
    %1209 = vmatpush.bf16.msra.mxu0 0
    %1210 = vmatpush.bf16.msra.mxu0 0
    %1211 = vmatpush.bf16.msra.mxu0 0
    %1212 = vmatpush.bf16.msra.mxu0 0
    %1213 = vmatpush.bf16.msra.mxu0 %v819
    %1214 = vmatpush.bf16.msra.mxu0 %v755
    %1215 = vmatmul.bf16.gmra.mxu0 %v997
    %v1216 = vpop.f32.mrf.mxu0
    %v1217 = vadd.f32 %v243, %v1216
    %v1218 = vpop.f32.mrf.mxu0
    %1219 = vdwg.mxu0
    %1220 = vmatpush.bf16.msra.mxu0 0
    %1221 = vmatpush.bf16.msra.mxu0 0
    %1222 = vmatpush.bf16.msra.mxu0 0
    %1223 = vmatpush.bf16.msra.mxu0 0
    %1224 = vmatpush.bf16.msra.mxu0 0
    %1225 = vmatpush.bf16.msra.mxu0 0
    %1226 = vmatpush.bf16.msra.mxu0 %v820
    %1227 = vmatpush.bf16.msra.mxu0 %v756
    %1228 = vmatmul.bf16.gmra.mxu0 %v997
    %v1229 = vpop.f32.mrf.mxu0
    %v1230 = vadd.f32 %v244, %v1229
    %v1231 = vpop.f32.mrf.mxu0
    %1232 = vdwg.mxu0
    %1233 = vmatpush.bf16.msra.mxu0 0
    %1234 = vmatpush.bf16.msra.mxu0 0
    %1235 = vmatpush.bf16.msra.mxu0 0
    %1236 = vmatpush.bf16.msra.mxu0 0
    %1237 = vmatpush.bf16.msra.mxu0 0
    %1238 = vmatpush.bf16.msra.mxu0 0
    %1239 = vmatpush.bf16.msra.mxu0 %v821
    %1240 = vmatpush.bf16.msra.mxu0 %v757
    %1241 = vmatmul.bf16.gmra.mxu0 %v997
    %v1242 = vpop.f32.mrf.mxu0
    %v1243 = vadd.f32 %v245, %v1242
    %v1244 = vpop.f32.mrf.mxu0
    %1245 = vdwg.mxu0
    %1246 = vmatpush.bf16.msra.mxu0 0
    %1247 = vmatpush.bf16.msra.mxu0 0
    %1248 = vmatpush.bf16.msra.mxu0 0
    %1249 = vmatpush.bf16.msra.mxu0 0
    %1250 = vmatpush.bf16.msra.mxu0 0
    %1251 = vmatpush.bf16.msra.mxu0 0
    %1252 = vmatpush.bf16.msra.mxu0 %v822
    %1253 = vmatpush.bf16.msra.mxu0 %v758
    %1254 = vmatmul.bf16.gmra.mxu0 %v997
    %v1255 = vpop.f32.mrf.mxu0
    %v1256 = vadd.f32 %v246, %v1255
    %v1257 = vpop.f32.mrf.mxu0
    %1258 = vdwg.mxu0
    %1259 = vmatpush.bf16.msra.mxu0 0
    %1260 = vmatpush.bf16.msra.mxu0 0
    %1261 = vmatpush.bf16.msra.mxu0 0
    %1262 = vmatpush.bf16.msra.mxu0 0
    %1263 = vmatpush.bf16.msra.mxu0 0
    %1264 = vmatpush.bf16.msra.mxu0 0
    %1265 = vmatpush.bf16.msra.mxu0 %v823
    %1266 = vmatpush.bf16.msra.mxu0 %v759
    %1267 = vmatmul.bf16.gmra.mxu0 %v997
    %v1268 = vpop.f32.mrf.mxu0
    %v1269 = vadd.f32 %v247, %v1268
    %v1270 = vpop.f32.mrf.mxu0
    %1271 = vdwg.mxu0
    %1272 = vmatpush.bf16.msra.mxu0 0
    %1273 = vmatpush.bf16.msra.mxu0 0
    %1274 = vmatpush.bf16.msra.mxu0 0
    %1275 = vmatpush.bf16.msra.mxu0 0
    %1276 = vmatpush.bf16.msra.mxu0 0
    %1277 = vmatpush.bf16.msra.mxu0 0
    %1278 = vmatpush.bf16.msra.mxu0 %v824
    %1279 = vmatpush.bf16.msra.mxu0 %v760
    %1280 = vmatmul.bf16.gmra.mxu0 %v997
    %v1281 = vpop.f32.mrf.mxu0
    %v1282 = vadd.f32 %v248, %v1281
    %v1283 = vpop.f32.mrf.mxu0
    %1284 = vdwg.mxu0
    %1285 = vmatpush.bf16.msra.mxu0 0
    %1286 = vmatpush.bf16.msra.mxu0 0
    %1287 = vmatpush.bf16.msra.mxu0 0
    %1288 = vmatpush.bf16.msra.mxu0 0
    %1289 = vmatpush.bf16.msra.mxu0 0
    %1290 = vmatpush.bf16.msra.mxu0 0
    %1291 = vmatpush.bf16.msra.mxu0 %v825
    %1292 = vmatpush.bf16.msra.mxu0 %v761
    %1293 = vmatmul.bf16.gmra.mxu0 %v997
    %v1294 = vpop.f32.mrf.mxu0
    %v1295 = vadd.f32 %v249, %v1294
    %v1296 = vpop.f32.mrf.mxu0
    %1297 = vdwg.mxu0
    %1298 = vmatpush.bf16.msra.mxu0 0
    %1299 = vmatpush.bf16.msra.mxu0 0
    %1300 = vmatpush.bf16.msra.mxu0 0
    %1301 = vmatpush.bf16.msra.mxu0 0
    %1302 = vmatpush.bf16.msra.mxu0 0
    %1303 = vmatpush.bf16.msra.mxu0 0
    %1304 = vmatpush.bf16.msra.mxu0 %v826
    %1305 = vmatpush.bf16.msra.mxu0 %v762
    %1306 = vmatmul.bf16.gmra.mxu0 %v997
    %v1307 = vpop.f32.mrf.mxu0
    %v1308 = vadd.f32 %v250, %v1307
    %v1309 = vpop.f32.mrf.mxu0
    %1310 = vdwg.mxu0
    %1311 = vmatpush.bf16.msra.mxu0 0
    %1312 = vmatpush.bf16.msra.mxu0 0
    %1313 = vmatpush.bf16.msra.mxu0 0
    %1314 = vmatpush.bf16.msra.mxu0 0
    %1315 = vmatpush.bf16.msra.mxu0 0
    %1316 = vmatpush.bf16.msra.mxu0 0
    %1317 = vmatpush.bf16.msra.mxu0 %v827
    %1318 = vmatpush.bf16.msra.mxu0 %v763
    %1319 = vmatmul.bf16.gmra.mxu0 %v997
    %v1320 = vpop.f32.mrf.mxu0
    %v1321 = vadd.f32 %v251, %v1320
    %v1322 = vpop.f32.mrf.mxu0
    %1323 = vdwg.mxu0
    %1324 = vmatpush.bf16.msra.mxu0 0
    %1325 = vmatpush.bf16.msra.mxu0 0
    %1326 = vmatpush.bf16.msra.mxu0 0
    %1327 = vmatpush.bf16.msra.mxu0 0
    %1328 = vmatpush.bf16.msra.mxu0 0
    %1329 = vmatpush.bf16.msra.mxu0 0
    %1330 = vmatpush.bf16.msra.mxu0 %v828
    %1331 = vmatpush.bf16.msra.mxu0 %v764
    %1332 = vmatmul.bf16.gmra.mxu0 %v997
    %v1333 = vpop.f32.mrf.mxu0
    %v1334 = vadd.f32 %v252, %v1333
    %v1335 = vpop.f32.mrf.mxu0
    %1336 = vdwg.mxu0
    %1337 = vmatpush.bf16.msra.mxu0 0
    %1338 = vmatpush.bf16.msra.mxu0 0
    %1339 = vmatpush.bf16.msra.mxu0 0
    %1340 = vmatpush.bf16.msra.mxu0 0
    %1341 = vmatpush.bf16.msra.mxu0 0
    %1342 = vmatpush.bf16.msra.mxu0 0
    %1343 = vmatpush.bf16.msra.mxu0 %v829
    %1344 = vmatpush.bf16.msra.mxu0 %v765
    %1345 = vmatmul.bf16.gmra.mxu0 %v997
    %v1346 = vpop.f32.mrf.mxu0
    %v1347 = vadd.f32 %v253, %v1346
    %v1348 = vpop.f32.mrf.mxu0
    %1349 = vdwg.mxu0
    %1350 = vmatpush.bf16.msra.mxu0 0
    %1351 = vmatpush.bf16.msra.mxu0 0
    %1352 = vmatpush.bf16.msra.mxu0 0
    %1353 = vmatpush.bf16.msra.mxu0 0
    %1354 = vmatpush.bf16.msra.mxu0 0
    %1355 = vmatpush.bf16.msra.mxu0 0
    %1356 = vmatpush.bf16.msra.mxu0 %v830
    %1357 = vmatpush.bf16.msra.mxu0 %v766
    %1358 = vmatmul.bf16.gmra.mxu0 %v997
    %v1359 = vpop.f32.mrf.mxu0
    %v1360 = vadd.f32 %v254, %v1359
    %v1361 = vpop.f32.mrf.mxu0
    %1362 = vdwg.mxu0
    %1363 = vmatpush.bf16.msra.mxu0 0
    %1364 = vmatpush.bf16.msra.mxu0 0
    %1365 = vmatpush.bf16.msra.mxu0 0
    %1366 = vmatpush.bf16.msra.mxu0 0
    %1367 = vmatpush.bf16.msra.mxu0 0
    %1368 = vmatpush.bf16.msra.mxu0 0
    %1369 = vmatpush.bf16.msra.mxu0 %v831
    %1370 = vmatpush.bf16.msra.mxu0 %v767
    %1371 = vmatmul.bf16.gmra.mxu0 %v997
    %v1372 = vpop.f32.mrf.mxu0
    %v1373 = vadd.f32 %v255, %v1372
    %v1374 = vpop.f32.mrf.mxu0
    %1375 = vdwg.mxu0
    %1376 = vmatpush.bf16.msra.mxu0 0
    %1377 = vmatpush.bf16.msra.mxu0 0
    %1378 = vmatpush.bf16.msra.mxu0 0
    %1379 = vmatpush.bf16.msra.mxu0 0
    %1380 = vmatpush.bf16.msra.mxu0 0
    %1381 = vmatpush.bf16.msra.mxu0 0
    %1382 = vmatpush.bf16.msra.mxu0 %v832
    %1383 = vmatpush.bf16.msra.mxu0 %v768
    %1384 = vmatmul.bf16.gmra.mxu0 %v997
    %v1385 = vpop.f32.mrf.mxu0
    %v1386 = vadd.f32 %v256, %v1385
    %v1387 = vpop.f32.mrf.mxu0
    %1388 = vdwg.mxu0
    %1389 = vmatpush.bf16.msra.mxu0 0
    %1390 = vmatpush.bf16.msra.mxu0 0
    %1391 = vmatpush.bf16.msra.mxu0 0
    %1392 = vmatpush.bf16.msra.mxu0 0
    %1393 = vmatpush.bf16.msra.mxu0 0
    %1394 = vmatpush.bf16.msra.mxu0 0
    %1395 = vmatpush.bf16.msra.mxu0 %v833
    %1396 = vmatpush.bf16.msra.mxu0 %v769
    %1397 = vmatmul.bf16.gmra.mxu0 %v997
    %v1398 = vpop.f32.mrf.mxu0
    %v1399 = vadd.f32 %v257, %v1398
    %v1400 = vpop.f32.mrf.mxu0
    %1401 = vdwg.mxu0
    %1402 = vmatpush.bf16.msra.mxu0 0
    %1403 = vmatpush.bf16.msra.mxu0 0
    %1404 = vmatpush.bf16.msra.mxu0 0
    %1405 = vmatpush.bf16.msra.mxu0 0
    %1406 = vmatpush.bf16.msra.mxu0 0
    %1407 = vmatpush.bf16.msra.mxu0 0
    %1408 = vmatpush.bf16.msra.mxu0 %v834
    %1409 = vmatpush.bf16.msra.mxu0 %v770
    %1410 = vmatmul.bf16.gmra.mxu0 %v997
    %v1411 = vpop.f32.mrf.mxu0
    %v1412 = vadd.f32 %v258, %v1411
    %v1413 = vpop.f32.mrf.mxu0
    %1414 = vdwg.mxu0
    %1415 = vmatpush.bf16.msra.mxu0 0
    %1416 = vmatpush.bf16.msra.mxu0 0
    %1417 = vmatpush.bf16.msra.mxu0 0
    %1418 = vmatpush.bf16.msra.mxu0 0
    %1419 = vmatpush.bf16.msra.mxu0 0
    %1420 = vmatpush.bf16.msra.mxu0 0
    %1421 = vmatpush.bf16.msra.mxu0 %v835
    %1422 = vmatpush.bf16.msra.mxu0 %v771
    %1423 = vmatmul.bf16.gmra.mxu0 %v997
    %v1424 = vpop.f32.mrf.mxu0
    %v1425 = vadd.f32 %v259, %v1424
    %v1426 = vpop.f32.mrf.mxu0
    %1427 = vdwg.mxu0
    %1428 = vmatpush.bf16.msra.mxu0 0
    %1429 = vmatpush.bf16.msra.mxu0 0
    %1430 = vmatpush.bf16.msra.mxu0 0
    %1431 = vmatpush.bf16.msra.mxu0 0
    %1432 = vmatpush.bf16.msra.mxu0 0
    %1433 = vmatpush.bf16.msra.mxu0 0
    %1434 = vmatpush.bf16.msra.mxu0 %v836
    %1435 = vmatpush.bf16.msra.mxu0 %v772
    %1436 = vmatmul.bf16.gmra.mxu0 %v997
    %v1437 = vpop.f32.mrf.mxu0
    %v1438 = vadd.f32 %v260, %v1437
    %v1439 = vpop.f32.mrf.mxu0
    %1440 = vdwg.mxu0
    %1441 = vmatpush.bf16.msra.mxu0 0
    %1442 = vmatpush.bf16.msra.mxu0 0
    %1443 = vmatpush.bf16.msra.mxu0 0
    %1444 = vmatpush.bf16.msra.mxu0 0
    %1445 = vmatpush.bf16.msra.mxu0 0
    %1446 = vmatpush.bf16.msra.mxu0 0
    %1447 = vmatpush.bf16.msra.mxu0 %v837
    %1448 = vmatpush.bf16.msra.mxu0 %v773
    %1449 = vmatmul.bf16.gmra.mxu0 %v997
    %v1450 = vpop.f32.mrf.mxu0
    %v1451 = vadd.f32 %v261, %v1450
    %v1452 = vpop.f32.mrf.mxu0
    %1453 = vdwg.mxu0
    %1454 = vmatpush.bf16.msra.mxu0 0
    %1455 = vmatpush.bf16.msra.mxu0 0
    %1456 = vmatpush.bf16.msra.mxu0 0
    %1457 = vmatpush.bf16.msra.mxu0 0
    %1458 = vmatpush.bf16.msra.mxu0 0
    %1459 = vmatpush.bf16.msra.mxu0 0
    %1460 = vmatpush.bf16.msra.mxu0 %v838
    %1461 = vmatpush.bf16.msra.mxu0 %v774
    %1462 = vmatmul.bf16.gmra.mxu0 %v997
    %v1463 = vpop.f32.mrf.mxu0
    %v1464 = vadd.f32 %v262, %v1463
    %v1465 = vpop.f32.mrf.mxu0
    %1466 = vdwg.mxu0
    %1467 = vmatpush.bf16.msra.mxu0 0
    %1468 = vmatpush.bf16.msra.mxu0 0
    %1469 = vmatpush.bf16.msra.mxu0 0
    %1470 = vmatpush.bf16.msra.mxu0 0
    %1471 = vmatpush.bf16.msra.mxu0 0
    %1472 = vmatpush.bf16.msra.mxu0 0
    %1473 = vmatpush.bf16.msra.mxu0 %v839
    %1474 = vmatpush.bf16.msra.mxu0 %v775
    %1475 = vmatmul.bf16.gmra.mxu0 %v997
    %v1476 = vpop.f32.mrf.mxu0
    %v1477 = vadd.f32 %v263, %v1476
    %v1478 = vpop.f32.mrf.mxu0
    %1479 = vdwg.mxu0
    %1480 = vmatpush.bf16.msra.mxu0 0
    %1481 = vmatpush.bf16.msra.mxu0 0
    %1482 = vmatpush.bf16.msra.mxu0 0
    %1483 = vmatpush.bf16.msra.mxu0 0
    %1484 = vmatpush.bf16.msra.mxu0 0
    %1485 = vmatpush.bf16.msra.mxu0 0
    %1486 = vmatpush.bf16.msra.mxu0 %v840
    %1487 = vmatpush.bf16.msra.mxu0 %v776
    %1488 = vmatmul.bf16.gmra.mxu0 %v997
    %v1489 = vpop.f32.mrf.mxu0
    %v1490 = vadd.f32 %v264, %v1489
    %v1491 = vpop.f32.mrf.mxu0
    %1492 = vdwg.mxu0
    %1493 = vmatpush.bf16.msra.mxu0 0
    %1494 = vmatpush.bf16.msra.mxu0 0
    %1495 = vmatpush.bf16.msra.mxu0 0
    %1496 = vmatpush.bf16.msra.mxu0 0
    %1497 = vmatpush.bf16.msra.mxu0 0
    %1498 = vmatpush.bf16.msra.mxu0 0
    %1499 = vmatpush.bf16.msra.mxu0 %v841
    %1500 = vmatpush.bf16.msra.mxu0 %v777
    %1501 = vmatmul.bf16.gmra.mxu0 %v997
    %v1502 = vpop.f32.mrf.mxu0
    %v1503 = vadd.f32 %v265, %v1502
    %v1504 = vpop.f32.mrf.mxu0
    %1505 = vdwg.mxu0
    %1506 = vmatpush.bf16.msra.mxu0 0
    %1507 = vmatpush.bf16.msra.mxu0 0
    %1508 = vmatpush.bf16.msra.mxu0 0
    %1509 = vmatpush.bf16.msra.mxu0 0
    %1510 = vmatpush.bf16.msra.mxu0 0
    %1511 = vmatpush.bf16.msra.mxu0 0
    %1512 = vmatpush.bf16.msra.mxu0 %v842
    %1513 = vmatpush.bf16.msra.mxu0 %v778
    %1514 = vmatmul.bf16.gmra.mxu0 %v997
    %v1515 = vpop.f32.mrf.mxu0
    %v1516 = vadd.f32 %v266, %v1515
    %v1517 = vpop.f32.mrf.mxu0
    %1518 = vdwg.mxu0
    %1519 = vmatpush.bf16.msra.mxu0 0
    %1520 = vmatpush.bf16.msra.mxu0 0
    %1521 = vmatpush.bf16.msra.mxu0 0
    %1522 = vmatpush.bf16.msra.mxu0 0
    %1523 = vmatpush.bf16.msra.mxu0 0
    %1524 = vmatpush.bf16.msra.mxu0 0
    %1525 = vmatpush.bf16.msra.mxu0 %v843
    %1526 = vmatpush.bf16.msra.mxu0 %v779
    %1527 = vmatmul.bf16.gmra.mxu0 %v997
    %v1528 = vpop.f32.mrf.mxu0
    %v1529 = vadd.f32 %v267, %v1528
    %v1530 = vpop.f32.mrf.mxu0
    %1531 = vdwg.mxu0
    %1532 = vmatpush.bf16.msra.mxu0 0
    %1533 = vmatpush.bf16.msra.mxu0 0
    %1534 = vmatpush.bf16.msra.mxu0 0
    %1535 = vmatpush.bf16.msra.mxu0 0
    %1536 = vmatpush.bf16.msra.mxu0 0
    %1537 = vmatpush.bf16.msra.mxu0 0
    %1538 = vmatpush.bf16.msra.mxu0 %v844
    %1539 = vmatpush.bf16.msra.mxu0 %v780
    %1540 = vmatmul.bf16.gmra.mxu0 %v997
    %v1541 = vpop.f32.mrf.mxu0
    %v1542 = vadd.f32 %v268, %v1541
    %v1543 = vpop.f32.mrf.mxu0
    %1544 = vdwg.mxu0
    %1545 = vmatpush.bf16.msra.mxu0 0
    %1546 = vmatpush.bf16.msra.mxu0 0
    %1547 = vmatpush.bf16.msra.mxu0 0
    %1548 = vmatpush.bf16.msra.mxu0 0
    %1549 = vmatpush.bf16.msra.mxu0 0
    %1550 = vmatpush.bf16.msra.mxu0 0
    %1551 = vmatpush.bf16.msra.mxu0 %v845
    %1552 = vmatpush.bf16.msra.mxu0 %v781
    %1553 = vmatmul.bf16.gmra.mxu0 %v997
    %v1554 = vpop.f32.mrf.mxu0
    %v1555 = vadd.f32 %v269, %v1554
    %v1556 = vpop.f32.mrf.mxu0
    %1557 = vdwg.mxu0
    %1558 = vmatpush.bf16.msra.mxu0 0
    %1559 = vmatpush.bf16.msra.mxu0 0
    %1560 = vmatpush.bf16.msra.mxu0 0
    %1561 = vmatpush.bf16.msra.mxu0 0
    %1562 = vmatpush.bf16.msra.mxu0 0
    %1563 = vmatpush.bf16.msra.mxu0 0
    %1564 = vmatpush.bf16.msra.mxu0 %v846
    %1565 = vmatpush.bf16.msra.mxu0 %v782
    %1566 = vmatmul.bf16.gmra.mxu0 %v997
    %v1567 = vpop.f32.mrf.mxu0
    %v1568 = vadd.f32 %v270, %v1567
    %v1569 = vpop.f32.mrf.mxu0
    %1570 = vdwg.mxu0
    %1571 = vmatpush.bf16.msra.mxu0 0
    %1572 = vmatpush.bf16.msra.mxu0 0
    %1573 = vmatpush.bf16.msra.mxu0 0
    %1574 = vmatpush.bf16.msra.mxu0 0
    %1575 = vmatpush.bf16.msra.mxu0 0
    %1576 = vmatpush.bf16.msra.mxu0 0
    %1577 = vmatpush.bf16.msra.mxu0 %v847
    %1578 = vmatpush.bf16.msra.mxu0 %v783
    %1579 = vmatmul.bf16.gmra.mxu0 %v997
    %v1580 = vpop.f32.mrf.mxu0
    %v1581 = vadd.f32 %v271, %v1580
    %v1582 = vpop.f32.mrf.mxu0
    %1583 = vdwg.mxu0
    %1584 = vmatpush.bf16.msra.mxu0 0
    %1585 = vmatpush.bf16.msra.mxu0 0
    %1586 = vmatpush.bf16.msra.mxu0 0
    %1587 = vmatpush.bf16.msra.mxu0 0
    %1588 = vmatpush.bf16.msra.mxu0 0
    %1589 = vmatpush.bf16.msra.mxu0 0
    %1590 = vmatpush.bf16.msra.mxu0 %v848
    %1591 = vmatpush.bf16.msra.mxu0 %v784
    %1592 = vmatmul.bf16.gmra.mxu0 %v997
    %v1593 = vpop.f32.mrf.mxu0
    %v1594 = vadd.f32 %v272, %v1593
    %v1595 = vpop.f32.mrf.mxu0
    %1596 = vdwg.mxu0
    %1597 = vmatpush.bf16.msra.mxu0 0
    %1598 = vmatpush.bf16.msra.mxu0 0
    %1599 = vmatpush.bf16.msra.mxu0 0
    %1600 = vmatpush.bf16.msra.mxu0 0
    %1601 = vmatpush.bf16.msra.mxu0 0
    %1602 = vmatpush.bf16.msra.mxu0 0
    %1603 = vmatpush.bf16.msra.mxu0 %v849
    %1604 = vmatpush.bf16.msra.mxu0 %v785
    %1605 = vmatmul.bf16.gmra.mxu0 %v997
    %v1606 = vpop.f32.mrf.mxu0
    %v1607 = vadd.f32 %v273, %v1606
    %v1608 = vpop.f32.mrf.mxu0
    %1609 = vdwg.mxu0
    %1610 = vmatpush.bf16.msra.mxu0 0
    %1611 = vmatpush.bf16.msra.mxu0 0
    %1612 = vmatpush.bf16.msra.mxu0 0
    %1613 = vmatpush.bf16.msra.mxu0 0
    %1614 = vmatpush.bf16.msra.mxu0 0
    %1615 = vmatpush.bf16.msra.mxu0 0
    %1616 = vmatpush.bf16.msra.mxu0 %v850
    %1617 = vmatpush.bf16.msra.mxu0 %v786
    %1618 = vmatmul.bf16.gmra.mxu0 %v997
    %v1619 = vpop.f32.mrf.mxu0
    %v1620 = vadd.f32 %v274, %v1619
    %v1621 = vpop.f32.mrf.mxu0
    %1622 = vdwg.mxu0
    %1623 = vmatpush.bf16.msra.mxu0 0
    %1624 = vmatpush.bf16.msra.mxu0 0
    %1625 = vmatpush.bf16.msra.mxu0 0
    %1626 = vmatpush.bf16.msra.mxu0 0
    %1627 = vmatpush.bf16.msra.mxu0 0
    %1628 = vmatpush.bf16.msra.mxu0 0
    %1629 = vmatpush.bf16.msra.mxu0 %v851
    %1630 = vmatpush.bf16.msra.mxu0 %v787
    %1631 = vmatmul.bf16.gmra.mxu0 %v997
    %v1632 = vpop.f32.mrf.mxu0
    %v1633 = vadd.f32 %v275, %v1632
    %v1634 = vpop.f32.mrf.mxu0
    %1635 = vdwg.mxu0
    %1636 = vmatpush.bf16.msra.mxu0 0
    %1637 = vmatpush.bf16.msra.mxu0 0
    %1638 = vmatpush.bf16.msra.mxu0 0
    %1639 = vmatpush.bf16.msra.mxu0 0
    %1640 = vmatpush.bf16.msra.mxu0 0
    %1641 = vmatpush.bf16.msra.mxu0 0
    %1642 = vmatpush.bf16.msra.mxu0 %v852
    %1643 = vmatpush.bf16.msra.mxu0 %v788
    %1644 = vmatmul.bf16.gmra.mxu0 %v997
    %v1645 = vpop.f32.mrf.mxu0
    %v1646 = vadd.f32 %v276, %v1645
    %v1647 = vpop.f32.mrf.mxu0
    %1648 = vdwg.mxu0
    %1649 = vmatpush.bf16.msra.mxu0 0
    %1650 = vmatpush.bf16.msra.mxu0 0
    %1651 = vmatpush.bf16.msra.mxu0 0
    %1652 = vmatpush.bf16.msra.mxu0 0
    %1653 = vmatpush.bf16.msra.mxu0 0
    %1654 = vmatpush.bf16.msra.mxu0 0
    %1655 = vmatpush.bf16.msra.mxu0 %v853
    %1656 = vmatpush.bf16.msra.mxu0 %v789
    %1657 = vmatmul.bf16.gmra.mxu0 %v997
    %v1658 = vpop.f32.mrf.mxu0
    %v1659 = vadd.f32 %v277, %v1658
    %v1660 = vpop.f32.mrf.mxu0
    %1661 = vdwg.mxu0
    %1662 = vmatpush.bf16.msra.mxu0 0
    %1663 = vmatpush.bf16.msra.mxu0 0
    %1664 = vmatpush.bf16.msra.mxu0 0
    %1665 = vmatpush.bf16.msra.mxu0 0
    %1666 = vmatpush.bf16.msra.mxu0 0
    %1667 = vmatpush.bf16.msra.mxu0 0
    %1668 = vmatpush.bf16.msra.mxu0 %v854
    %1669 = vmatpush.bf16.msra.mxu0 %v790
    %1670 = vmatmul.bf16.gmra.mxu0 %v997
    %v1671 = vpop.f32.mrf.mxu0
    %v1672 = vadd.f32 %v278, %v1671
    %v1673 = vpop.f32.mrf.mxu0
    %1674 = vdwg.mxu0
    %1675 = vmatpush.bf16.msra.mxu0 0
    %1676 = vmatpush.bf16.msra.mxu0 0
    %1677 = vmatpush.bf16.msra.mxu0 0
    %1678 = vmatpush.bf16.msra.mxu0 0
    %1679 = vmatpush.bf16.msra.mxu0 0
    %1680 = vmatpush.bf16.msra.mxu0 0
    %1681 = vmatpush.bf16.msra.mxu0 %v855
    %1682 = vmatpush.bf16.msra.mxu0 %v791
    %1683 = vmatmul.bf16.gmra.mxu0 %v997
    %v1684 = vpop.f32.mrf.mxu0
    %v1685 = vadd.f32 %v279, %v1684
    %v1686 = vpop.f32.mrf.mxu0
    %1687 = vdwg.mxu0
    %1688 = vmatpush.bf16.msra.mxu0 0
    %1689 = vmatpush.bf16.msra.mxu0 0
    %1690 = vmatpush.bf16.msra.mxu0 0
    %1691 = vmatpush.bf16.msra.mxu0 0
    %1692 = vmatpush.bf16.msra.mxu0 0
    %1693 = vmatpush.bf16.msra.mxu0 0
    %1694 = vmatpush.bf16.msra.mxu0 %v856
    %1695 = vmatpush.bf16.msra.mxu0 %v792
    %1696 = vmatmul.bf16.gmra.mxu0 %v997
    %v1697 = vpop.f32.mrf.mxu0
    %v1698 = vadd.f32 %v280, %v1697
    %v1699 = vpop.f32.mrf.mxu0
    %1700 = vdwg.mxu0
    %1701 = vmatpush.bf16.msra.mxu0 0
    %1702 = vmatpush.bf16.msra.mxu0 0
    %1703 = vmatpush.bf16.msra.mxu0 0
    %1704 = vmatpush.bf16.msra.mxu0 0
    %1705 = vmatpush.bf16.msra.mxu0 0
    %1706 = vmatpush.bf16.msra.mxu0 0
    %1707 = vmatpush.bf16.msra.mxu0 %v857
    %1708 = vmatpush.bf16.msra.mxu0 %v793
    %1709 = vmatmul.bf16.gmra.mxu0 %v997
    %v1710 = vpop.f32.mrf.mxu0
    %v1711 = vadd.f32 %v281, %v1710
    %v1712 = vpop.f32.mrf.mxu0
    %1713 = vdwg.mxu0
    %1714 = vmatpush.bf16.msra.mxu0 0
    %1715 = vmatpush.bf16.msra.mxu0 0
    %1716 = vmatpush.bf16.msra.mxu0 0
    %1717 = vmatpush.bf16.msra.mxu0 0
    %1718 = vmatpush.bf16.msra.mxu0 0
    %1719 = vmatpush.bf16.msra.mxu0 0
    %1720 = vmatpush.bf16.msra.mxu0 %v858
    %1721 = vmatpush.bf16.msra.mxu0 %v794
    %1722 = vmatmul.bf16.gmra.mxu0 %v997
    %v1723 = vpop.f32.mrf.mxu0
    %v1724 = vadd.f32 %v282, %v1723
    %v1725 = vpop.f32.mrf.mxu0
    %1726 = vdwg.mxu0
    %1727 = vmatpush.bf16.msra.mxu0 0
    %1728 = vmatpush.bf16.msra.mxu0 0
    %1729 = vmatpush.bf16.msra.mxu0 0
    %1730 = vmatpush.bf16.msra.mxu0 0
    %1731 = vmatpush.bf16.msra.mxu0 0
    %1732 = vmatpush.bf16.msra.mxu0 0
    %1733 = vmatpush.bf16.msra.mxu0 %v859
    %1734 = vmatpush.bf16.msra.mxu0 %v795
    %1735 = vmatmul.bf16.gmra.mxu0 %v997
    %v1736 = vpop.f32.mrf.mxu0
    %v1737 = vadd.f32 %v283, %v1736
    %v1738 = vpop.f32.mrf.mxu0
    %1739 = vdwg.mxu0
    %1740 = vmatpush.bf16.msra.mxu0 0
    %1741 = vmatpush.bf16.msra.mxu0 0
    %1742 = vmatpush.bf16.msra.mxu0 0
    %1743 = vmatpush.bf16.msra.mxu0 0
    %1744 = vmatpush.bf16.msra.mxu0 0
    %1745 = vmatpush.bf16.msra.mxu0 0
    %1746 = vmatpush.bf16.msra.mxu0 %v860
    %1747 = vmatpush.bf16.msra.mxu0 %v796
    %1748 = vmatmul.bf16.gmra.mxu0 %v997
    %v1749 = vpop.f32.mrf.mxu0
    %v1750 = vadd.f32 %v284, %v1749
    %v1751 = vpop.f32.mrf.mxu0
    %1752 = vdwg.mxu0
    %1753 = vmatpush.bf16.msra.mxu0 0
    %1754 = vmatpush.bf16.msra.mxu0 0
    %1755 = vmatpush.bf16.msra.mxu0 0
    %1756 = vmatpush.bf16.msra.mxu0 0
    %1757 = vmatpush.bf16.msra.mxu0 0
    %1758 = vmatpush.bf16.msra.mxu0 0
    %1759 = vmatpush.bf16.msra.mxu0 %v861
    %1760 = vmatpush.bf16.msra.mxu0 %v797
    %1761 = vmatmul.bf16.gmra.mxu0 %v997
    %v1762 = vpop.f32.mrf.mxu0
    %v1763 = vadd.f32 %v285, %v1762
    %v1764 = vpop.f32.mrf.mxu0
    %1765 = vdwg.mxu0
    %1766 = vmatpush.bf16.msra.mxu0 0
    %1767 = vmatpush.bf16.msra.mxu0 0
    %1768 = vmatpush.bf16.msra.mxu0 0
    %1769 = vmatpush.bf16.msra.mxu0 0
    %1770 = vmatpush.bf16.msra.mxu0 0
    %1771 = vmatpush.bf16.msra.mxu0 0
    %1772 = vmatpush.bf16.msra.mxu0 %v862
    %1773 = vmatpush.bf16.msra.mxu0 %v798
    %1774 = vmatmul.bf16.gmra.mxu0 %v997
    %v1775 = vpop.f32.mrf.mxu0
    %v1776 = vadd.f32 %v286, %v1775
    %v1777 = vpop.f32.mrf.mxu0
    %1778 = vdwg.mxu0
    %1779 = vmatpush.bf16.msra.mxu0 0
    %1780 = vmatpush.bf16.msra.mxu0 0
    %1781 = vmatpush.bf16.msra.mxu0 0
    %1782 = vmatpush.bf16.msra.mxu0 0
    %1783 = vmatpush.bf16.msra.mxu0 0
    %1784 = vmatpush.bf16.msra.mxu0 0
    %1785 = vmatpush.bf16.msra.mxu0 %v863
    %1786 = vmatpush.bf16.msra.mxu0 %v799
    %1787 = vmatmul.bf16.gmra.mxu0 %v997
    %v1788 = vpop.f32.mrf.mxu0
    %v1789 = vadd.f32 %v287, %v1788
    %v1790 = vpop.f32.mrf.mxu0
    %1791 = vdwg.mxu0
    %1792 = vmatpush.bf16.msra.mxu0 0
    %1793 = vmatpush.bf16.msra.mxu0 0
    %1794 = vmatpush.bf16.msra.mxu0 0
    %1795 = vmatpush.bf16.msra.mxu0 0
    %1796 = vmatpush.bf16.msra.mxu0 0
    %1797 = vmatpush.bf16.msra.mxu0 0
    %1798 = vmatpush.bf16.msra.mxu0 %v864
    %1799 = vmatpush.bf16.msra.mxu0 %v800
    %1800 = vmatmul.bf16.gmra.mxu0 %v997
    %v1801 = vpop.f32.mrf.mxu0
    %v1802 = vadd.f32 %v288, %v1801
    %v1803 = vpop.f32.mrf.mxu0
    %1804 = vdwg.mxu0
    %1805 = vmatpush.bf16.msra.mxu0 0
    %1806 = vmatpush.bf16.msra.mxu0 0
    %1807 = vmatpush.bf16.msra.mxu0 0
    %1808 = vmatpush.bf16.msra.mxu0 0
    %1809 = vmatpush.bf16.msra.mxu0 0
    %1810 = vmatpush.bf16.msra.mxu0 0
    %1811 = vmatpush.bf16.msra.mxu0 %v865
    %1812 = vmatpush.bf16.msra.mxu0 %v801
    %1813 = vmatmul.bf16.gmra.mxu0 %v997
    %v1814 = vpop.f32.mrf.mxu0
    %v1815 = vadd.f32 %v289, %v1814
    %v1816 = vpop.f32.mrf.mxu0
    %1817 = vdwg.mxu0
    %1818 = vmatpush.bf16.msra.mxu0 0
    %1819 = vmatpush.bf16.msra.mxu0 0
    %1820 = vmatpush.bf16.msra.mxu0 0
    %1821 = vmatpush.bf16.msra.mxu0 0
    %1822 = vmatpush.bf16.msra.mxu0 0
    %1823 = vmatpush.bf16.msra.mxu0 0
    %1824 = vmatpush.bf16.msra.mxu0 %v866
    %1825 = vmatpush.bf16.msra.mxu0 %v802
    %1826 = vmatmul.bf16.gmra.mxu0 %v997
    %v1827 = vpop.f32.mrf.mxu0
    %v1828 = vadd.f32 %v290, %v1827
    %v1829 = vpop.f32.mrf.mxu0
    %1830 = vdwg.mxu0
    %v1831 = vmul.f32 %v1009, 0.01
    %v1832 = vmul.f32 %v1022, 0.01
    %v1833 = vmul.f32 %v1035, 0.01
    %v1834 = vmul.f32 %v1048, 0.01
    %v1835 = vmul.f32 %v1061, 0.01
    %v1836 = vmul.f32 %v1074, 0.01
    %v1837 = vmul.f32 %v1087, 0.01
    %v1838 = vmul.f32 %v1100, 0.01
    %v1839 = vmul.f32 %v1113, 0.01
    %v1840 = vmul.f32 %v1126, 0.01
    %v1841 = vmul.f32 %v1139, 0.01
    %v1842 = vmul.f32 %v1152, 0.01
    %v1843 = vmul.f32 %v1165, 0.01
    %v1844 = vmul.f32 %v1178, 0.01
    %v1845 = vmul.f32 %v1191, 0.01
    %v1846 = vmul.f32 %v1204, 0.01
    %v1847 = vmul.f32 %v1217, 0.01
    %v1848 = vmul.f32 %v1230, 0.01
    %v1849 = vmul.f32 %v1243, 0.01
    %v1850 = vmul.f32 %v1256, 0.01
    %v1851 = vmul.f32 %v1269, 0.01
    %v1852 = vmul.f32 %v1282, 0.01
    %v1853 = vmul.f32 %v1295, 0.01
    %v1854 = vmul.f32 %v1308, 0.01
    %v1855 = vmul.f32 %v1321, 0.01
    %v1856 = vmul.f32 %v1334, 0.01
    %v1857 = vmul.f32 %v1347, 0.01
    %v1858 = vmul.f32 %v1360, 0.01
    %v1859 = vmul.f32 %v1373, 0.01
    %v1860 = vmul.f32 %v1386, 0.01
    %v1861 = vmul.f32 %v1399, 0.01
    %v1862 = vmul.f32 %v1412, 0.01
    %v1863 = vmul.f32 %v1425, 0.01
    %v1864 = vmul.f32 %v1438, 0.01
    %v1865 = vmul.f32 %v1451, 0.01
    %v1866 = vmul.f32 %v1464, 0.01
    %v1867 = vmul.f32 %v1477, 0.01
    %v1868 = vmul.f32 %v1490, 0.01
    %v1869 = vmul.f32 %v1503, 0.01
    %v1870 = vmul.f32 %v1516, 0.01
    %v1871 = vmul.f32 %v1529, 0.01
    %v1872 = vmul.f32 %v1542, 0.01
    %v1873 = vmul.f32 %v1555, 0.01
    %v1874 = vmul.f32 %v1568, 0.01
    %v1875 = vmul.f32 %v1581, 0.01
    %v1876 = vmul.f32 %v1594, 0.01
    %v1877 = vmul.f32 %v1607, 0.01
    %v1878 = vmul.f32 %v1620, 0.01
    %v1879 = vmul.f32 %v1633, 0.01
    %v1880 = vmul.f32 %v1646, 0.01
    %v1881 = vmul.f32 %v1659, 0.01
    %v1882 = vmul.f32 %v1672, 0.01
    %v1883 = vmul.f32 %v1685, 0.01
    %v1884 = vmul.f32 %v1698, 0.01
    %v1885 = vmul.f32 %v1711, 0.01
    %v1886 = vmul.f32 %v1724, 0.01
    %v1887 = vmul.f32 %v1737, 0.01
    %v1888 = vmul.f32 %v1750, 0.01
    %v1889 = vmul.f32 %v1763, 0.01
    %v1890 = vmul.f32 %v1776, 0.01
    %v1891 = vmul.f32 %v1789, 0.01
    %v1892 = vmul.f32 %v1802, 0.01
    %v1893 = vmul.f32 %v1815, 0.01
    %v1894 = vmul.f32 %v1828, 0.01
    %v1895 = vmax.f32 %v1009, %v1831
    %v1896 = vmax.f32 %v1022, %v1832
    %v1897 = vmax.f32 %v1035, %v1833
    %v1898 = vmax.f32 %v1048, %v1834
    %v1899 = vmax.f32 %v1061, %v1835
    %v1900 = vmax.f32 %v1074, %v1836
    %v1901 = vmax.f32 %v1087, %v1837
    %v1902 = vmax.f32 %v1100, %v1838
    %v1903 = vmax.f32 %v1113, %v1839
    %v1904 = vmax.f32 %v1126, %v1840
    %v1905 = vmax.f32 %v1139, %v1841
    %v1906 = vmax.f32 %v1152, %v1842
    %v1907 = vmax.f32 %v1165, %v1843
    %v1908 = vmax.f32 %v1178, %v1844
    %v1909 = vmax.f32 %v1191, %v1845
    %v1910 = vmax.f32 %v1204, %v1846
    %v1911 = vmax.f32 %v1217, %v1847
    %v1912 = vmax.f32 %v1230, %v1848
    %v1913 = vmax.f32 %v1243, %v1849
    %v1914 = vmax.f32 %v1256, %v1850
    %v1915 = vmax.f32 %v1269, %v1851
    %v1916 = vmax.f32 %v1282, %v1852
    %v1917 = vmax.f32 %v1295, %v1853
    %v1918 = vmax.f32 %v1308, %v1854
    %v1919 = vmax.f32 %v1321, %v1855
    %v1920 = vmax.f32 %v1334, %v1856
    %v1921 = vmax.f32 %v1347, %v1857
    %v1922 = vmax.f32 %v1360, %v1858
    %v1923 = vmax.f32 %v1373, %v1859
    %v1924 = vmax.f32 %v1386, %v1860
    %v1925 = vmax.f32 %v1399, %v1861
    %v1926 = vmax.f32 %v1412, %v1862
    %v1927 = vmax.f32 %v1425, %v1863
    %v1928 = vmax.f32 %v1438, %v1864
    %v1929 = vmax.f32 %v1451, %v1865
    %v1930 = vmax.f32 %v1464, %v1866
    %v1931 = vmax.f32 %v1477, %v1867
    %v1932 = vmax.f32 %v1490, %v1868
    %v1933 = vmax.f32 %v1503, %v1869
    %v1934 = vmax.f32 %v1516, %v1870
    %v1935 = vmax.f32 %v1529, %v1871
    %v1936 = vmax.f32 %v1542, %v1872
    %v1937 = vmax.f32 %v1555, %v1873
    %v1938 = vmax.f32 %v1568, %v1874
    %v1939 = vmax.f32 %v1581, %v1875
    %v1940 = vmax.f32 %v1594, %v1876
    %v1941 = vmax.f32 %v1607, %v1877
    %v1942 = vmax.f32 %v1620, %v1878
    %v1943 = vmax.f32 %v1633, %v1879
    %v1944 = vmax.f32 %v1646, %v1880
    %v1945 = vmax.f32 %v1659, %v1881
    %v1946 = vmax.f32 %v1672, %v1882
    %v1947 = vmax.f32 %v1685, %v1883
    %v1948 = vmax.f32 %v1698, %v1884
    %v1949 = vmax.f32 %v1711, %v1885
    %v1950 = vmax.f32 %v1724, %v1886
    %v1951 = vmax.f32 %v1737, %v1887
    %v1952 = vmax.f32 %v1750, %v1888
    %v1953 = vmax.f32 %v1763, %v1889
    %v1954 = vmax.f32 %v1776, %v1890
    %v1955 = vmax.f32 %v1789, %v1891
    %v1956 = vmax.f32 %v1802, %v1892
    %v1957 = vmax.f32 %v1815, %v1893
    %v1958 = vmax.f32 %v1828, %v1894
    %v1959 = vpack.c.bf16 %v1895, %v1895
    %v1960 = vpack.c.bf16 %v1896, %v1896
    %v1961 = vpack.c.bf16 %v1897, %v1897
    %v1962 = vpack.c.bf16 %v1898, %v1898
    %v1963 = vpack.c.bf16 %v1899, %v1899
    %v1964 = vpack.c.bf16 %v1900, %v1900
    %v1965 = vpack.c.bf16 %v1901, %v1901
    %v1966 = vpack.c.bf16 %v1902, %v1902
    %v1967 = vpack.c.bf16 %v1903, %v1903
    %v1968 = vpack.c.bf16 %v1904, %v1904
    %v1969 = vpack.c.bf16 %v1905, %v1905
    %v1970 = vpack.c.bf16 %v1906, %v1906
    %v1971 = vpack.c.bf16 %v1907, %v1907
    %v1972 = vpack.c.bf16 %v1908, %v1908
    %v1973 = vpack.c.bf16 %v1909, %v1909
    %v1974 = vpack.c.bf16 %v1910, %v1910
    %v1975 = vpack.c.bf16 %v1911, %v1911
    %v1976 = vpack.c.bf16 %v1912, %v1912
    %v1977 = vpack.c.bf16 %v1913, %v1913
    %v1978 = vpack.c.bf16 %v1914, %v1914
    %v1979 = vpack.c.bf16 %v1915, %v1915
    %v1980 = vpack.c.bf16 %v1916, %v1916
    %v1981 = vpack.c.bf16 %v1917, %v1917
    %v1982 = vpack.c.bf16 %v1918, %v1918
    %v1983 = vpack.c.bf16 %v1919, %v1919
    %v1984 = vpack.c.bf16 %v1920, %v1920
    %v1985 = vpack.c.bf16 %v1921, %v1921
    %v1986 = vpack.c.bf16 %v1922, %v1922
    %v1987 = vpack.c.bf16 %v1923, %v1923
    %v1988 = vpack.c.bf16 %v1924, %v1924
    %v1989 = vpack.c.bf16 %v1925, %v1925
    %v1990 = vpack.c.bf16 %v1926, %v1926
    %v1991 = vpack.c.bf16 %v1927, %v1927
    %v1992 = vpack.c.bf16 %v1928, %v1928
    %v1993 = vpack.c.bf16 %v1929, %v1929
    %v1994 = vpack.c.bf16 %v1930, %v1930
    %v1995 = vpack.c.bf16 %v1931, %v1931
    %v1996 = vpack.c.bf16 %v1932, %v1932
    %v1997 = vpack.c.bf16 %v1933, %v1933
    %v1998 = vpack.c.bf16 %v1934, %v1934
    %v1999 = vpack.c.bf16 %v1935, %v1935
    %v2000 = vpack.c.bf16 %v1936, %v1936
    %v2001 = vpack.c.bf16 %v1937, %v1937
    %v2002 = vpack.c.bf16 %v1938, %v1938
    %v2003 = vpack.c.bf16 %v1939, %v1939
    %v2004 = vpack.c.bf16 %v1940, %v1940
    %v2005 = vpack.c.bf16 %v1941, %v1941
    %v2006 = vpack.c.bf16 %v1942, %v1942
    %v2007 = vpack.c.bf16 %v1943, %v1943
    %v2008 = vpack.c.bf16 %v1944, %v1944
    %v2009 = vpack.c.bf16 %v1945, %v1945
    %v2010 = vpack.c.bf16 %v1946, %v1946
    %v2011 = vpack.c.bf16 %v1947, %v1947
    %v2012 = vpack.c.bf16 %v1948, %v1948
    %v2013 = vpack.c.bf16 %v1949, %v1949
    %v2014 = vpack.c.bf16 %v1950, %v1950
    %v2015 = vpack.c.bf16 %v1951, %v1951
    %v2016 = vpack.c.bf16 %v1952, %v1952
    %v2017 = vpack.c.bf16 %v1953, %v1953
    %v2018 = vpack.c.bf16 %v1954, %v1954
    %v2019 = vpack.c.bf16 %v1955, %v1955
    %v2020 = vpack.c.bf16 %v1956, %v1956
    %v2021 = vpack.c.bf16 %v1957, %v1957
    %v2022 = vpack.c.bf16 %v1958, %v1958
    %v2023 = vld [vmem:[#allocation8] sm:$0xff]
    %v2024 = vld [vmem:[#allocation8 + $0x8] sm:$0xff]
    %v2025 = vld [vmem:[#allocation8 + $0x10] sm:$0xff]
    %v2026 = vld [vmem:[#allocation8 + $0x18] sm:$0xff]
    %v2027 = vld [vmem:[#allocation8 + $0x20] sm:$0xff]
    %v2028 = vld [vmem:[#allocation8 + $0x28] sm:$0xff]
    %v2029 = vld [vmem:[#allocation8 + $0x30] sm:$0xff]
    %v2030 = vld [vmem:[#allocation8 + $0x38] sm:$0xff]
    %v2031 = vld [vmem:[#allocation8 + $0x40] sm:$0xff]
    %v2032 = vld [vmem:[#allocation8 + $0x48] sm:$0xff]
    %v2033 = vld [vmem:[#allocation8 + $0x50] sm:$0xff]
    %v2034 = vld [vmem:[#allocation8 + $0x58] sm:$0xff]
    %v2035 = vld [vmem:[#allocation8 + $0x60] sm:$0xff]
    %v2036 = vld [vmem:[#allocation8 + $0x68] sm:$0xff]
    %v2037 = vld [vmem:[#allocation8 + $0x70] sm:$0xff]
    %v2038 = vld [vmem:[#allocation8 + $0x78] sm:$0xff]
    %v2039 = vld [vmem:[#allocation8 + $0x80] sm:$0xff]
    %v2040 = vld [vmem:[#allocation8 + $0x88] sm:$0xff]
    %v2041 = vld [vmem:[#allocation8 + $0x90] sm:$0xff]
    %v2042 = vld [vmem:[#allocation8 + $0x98] sm:$0xff]
    %v2043 = vld [vmem:[#allocation8 + $0xa0] sm:$0xff]
    %v2044 = vld [vmem:[#allocation8 + $0xa8] sm:$0xff]
    %v2045 = vld [vmem:[#allocation8 + $0xb0] sm:$0xff]
    %v2046 = vld [vmem:[#allocation8 + $0xb8] sm:$0xff]
    %v2047 = vld [vmem:[#allocation8 + $0xc0] sm:$0xff]
    %v2048 = vld [vmem:[#allocation8 + $0xc8] sm:$0xff]
    %v2049 = vld [vmem:[#allocation8 + $0xd0] sm:$0xff]
    %v2050 = vld [vmem:[#allocation8 + $0xd8] sm:$0xff]
    %v2051 = vld [vmem:[#allocation8 + $0xe0] sm:$0xff]
    %v2052 = vld [vmem:[#allocation8 + $0xe8] sm:$0xff]
    %v2053 = vld [vmem:[#allocation8 + $0xf0] sm:$0xff]
    %v2054 = vld [vmem:[#allocation8 + $0xf8] sm:$0xff]
    %v2055 = vld [vmem:[#allocation8 + $0x100] sm:$0x11]
    %v2056 = vld [vmem:[#allocation8 + $0x108] sm:$0x11]
    %v2057 = vld [vmem:[#allocation8 + $0x110] sm:$0x11]
    %v2058 = vld [vmem:[#allocation8 + $0x118] sm:$0x11]
    %v2059 = vld [vmem:[#allocation8 + $0x120] sm:$0x11]
    %v2060 = vld [vmem:[#allocation8 + $0x128] sm:$0x11]
    %v2061 = vld [vmem:[#allocation8 + $0x130] sm:$0x11]
    %v2062 = vld [vmem:[#allocation8 + $0x138] sm:$0x11]
    %v2063 = vld [vmem:[#allocation8 + $0x140] sm:$0x11]
    %v2064 = vld [vmem:[#allocation8 + $0x148] sm:$0x11]
    %v2065 = vld [vmem:[#allocation8 + $0x150] sm:$0x11]
    %v2066 = vld [vmem:[#allocation8 + $0x158] sm:$0x11]
    %v2067 = vld [vmem:[#allocation8 + $0x160] sm:$0x11]
    %v2068 = vld [vmem:[#allocation8 + $0x168] sm:$0x11]
    %v2069 = vld [vmem:[#allocation8 + $0x170] sm:$0x11]
    %v2070 = vld [vmem:[#allocation8 + $0x178] sm:$0x11]
    %v2071 = vld [vmem:[#allocation8 + $0x180] sm:$0x11]
    %v2072 = vld [vmem:[#allocation8 + $0x188] sm:$0x11]
    %v2073 = vld [vmem:[#allocation8 + $0x190] sm:$0x11]
    %v2074 = vld [vmem:[#allocation8 + $0x198] sm:$0x11]
    %v2075 = vld [vmem:[#allocation8 + $0x1a0] sm:$0x11]
    %v2076 = vld [vmem:[#allocation8 + $0x1a8] sm:$0x11]
    %v2077 = vld [vmem:[#allocation8 + $0x1b0] sm:$0x11]
    %v2078 = vld [vmem:[#allocation8 + $0x1b8] sm:$0x11]
    %v2079 = vld [vmem:[#allocation8 + $0x1c0] sm:$0x11]
    %v2080 = vld [vmem:[#allocation8 + $0x1c8] sm:$0x11]
    %v2081 = vld [vmem:[#allocation8 + $0x1d0] sm:$0x11]
    %v2082 = vld [vmem:[#allocation8 + $0x1d8] sm:$0x11]
    %v2083 = vld [vmem:[#allocation8 + $0x1e0] sm:$0x11]
    %v2084 = vld [vmem:[#allocation8 + $0x1e8] sm:$0x11]
    %v2085 = vld [vmem:[#allocation8 + $0x1f0] sm:$0x11]
    %v2086 = vld [vmem:[#allocation8 + $0x1f8] sm:$0x11]
    %v2087 = vld [vmem:[%s4] sm:$0x1]
    %v2089 = vperm.slane %v2087, 0
    %v2155 = vunpack.c.l.b16 %v2023
    %v2156 = vunpack.c.h.b16 %v2023
    %v2157 = vunpack.c.l.b16 %v2024
    %v2158 = vunpack.c.h.b16 %v2024
    %v2159 = vunpack.c.l.b16 %v2025
    %v2160 = vunpack.c.h.b16 %v2025
    %v2161 = vunpack.c.l.b16 %v2026
    %v2162 = vunpack.c.h.b16 %v2026
    %v2163 = vunpack.c.l.b16 %v2027
    %v2164 = vunpack.c.h.b16 %v2027
    %v2165 = vunpack.c.l.b16 %v2028
    %v2166 = vunpack.c.h.b16 %v2028
    %v2167 = vunpack.c.l.b16 %v2029
    %v2168 = vunpack.c.h.b16 %v2029
    %v2169 = vunpack.c.l.b16 %v2030
    %v2170 = vunpack.c.h.b16 %v2030
    %v2171 = vunpack.c.l.b16 %v2031
    %v2172 = vunpack.c.h.b16 %v2031
    %v2173 = vunpack.c.l.b16 %v2032
    %v2174 = vunpack.c.h.b16 %v2032
    %v2175 = vunpack.c.l.b16 %v2033
    %v2176 = vunpack.c.h.b16 %v2033
    %v2177 = vunpack.c.l.b16 %v2034
    %v2178 = vunpack.c.h.b16 %v2034
    %v2179 = vunpack.c.l.b16 %v2035
    %v2180 = vunpack.c.h.b16 %v2035
    %v2181 = vunpack.c.l.b16 %v2036
    %v2182 = vunpack.c.h.b16 %v2036
    %v2183 = vunpack.c.l.b16 %v2037
    %v2184 = vunpack.c.h.b16 %v2037
    %v2185 = vunpack.c.l.b16 %v2038
    %v2186 = vunpack.c.h.b16 %v2038
    %v2187 = vunpack.c.l.b16 %v2039
    %v2188 = vunpack.c.h.b16 %v2039
    %v2189 = vunpack.c.l.b16 %v2040
    %v2190 = vunpack.c.h.b16 %v2040
    %v2191 = vunpack.c.l.b16 %v2041
    %v2192 = vunpack.c.h.b16 %v2041
    %v2193 = vunpack.c.l.b16 %v2042
    %v2194 = vunpack.c.h.b16 %v2042
    %v2195 = vunpack.c.l.b16 %v2043
    %v2196 = vunpack.c.h.b16 %v2043
    %v2197 = vunpack.c.l.b16 %v2044
    %v2198 = vunpack.c.h.b16 %v2044
    %v2199 = vunpack.c.l.b16 %v2045
    %v2200 = vunpack.c.h.b16 %v2045
    %v2201 = vunpack.c.l.b16 %v2046
    %v2202 = vunpack.c.h.b16 %v2046
    %v2203 = vunpack.c.l.b16 %v2047
    %v2204 = vunpack.c.h.b16 %v2047
    %v2205 = vunpack.c.l.b16 %v2048
    %v2206 = vunpack.c.h.b16 %v2048
    %v2207 = vunpack.c.l.b16 %v2049
    %v2208 = vunpack.c.h.b16 %v2049
    %v2209 = vunpack.c.l.b16 %v2050
    %v2210 = vunpack.c.h.b16 %v2050
    %v2211 = vunpack.c.l.b16 %v2051
    %v2212 = vunpack.c.h.b16 %v2051
    %v2213 = vunpack.c.l.b16 %v2052
    %v2214 = vunpack.c.h.b16 %v2052
    %v2215 = vunpack.c.l.b16 %v2053
    %v2216 = vunpack.c.h.b16 %v2053
    %v2217 = vunpack.c.l.b16 %v2054
    %v2218 = vunpack.c.h.b16 %v2054
    %v2219 = vunpack.c.l.b16 %v2055
    %v2220 = vunpack.c.h.b16 %v2055
    %v2221 = vunpack.c.l.b16 %v2056
    %v2222 = vunpack.c.h.b16 %v2056
    %v2223 = vunpack.c.l.b16 %v2057
    %v2224 = vunpack.c.h.b16 %v2057
    %v2225 = vunpack.c.l.b16 %v2058
    %v2226 = vunpack.c.h.b16 %v2058
    %v2227 = vunpack.c.l.b16 %v2059
    %v2228 = vunpack.c.h.b16 %v2059
    %v2229 = vunpack.c.l.b16 %v2060
    %v2230 = vunpack.c.h.b16 %v2060
    %v2231 = vunpack.c.l.b16 %v2061
    %v2232 = vunpack.c.h.b16 %v2061
    %v2233 = vunpack.c.l.b16 %v2062
    %v2234 = vunpack.c.h.b16 %v2062
    %v2235 = vunpack.c.l.b16 %v2063
    %v2236 = vunpack.c.h.b16 %v2063
    %v2237 = vunpack.c.l.b16 %v2064
    %v2238 = vunpack.c.h.b16 %v2064
    %v2239 = vunpack.c.l.b16 %v2065
    %v2240 = vunpack.c.h.b16 %v2065
    %v2241 = vunpack.c.l.b16 %v2066
    %v2242 = vunpack.c.h.b16 %v2066
    %v2243 = vunpack.c.l.b16 %v2067
    %v2244 = vunpack.c.h.b16 %v2067
    %v2245 = vunpack.c.l.b16 %v2068
    %v2246 = vunpack.c.h.b16 %v2068
    %v2247 = vunpack.c.l.b16 %v2069
    %v2248 = vunpack.c.h.b16 %v2069
    %v2249 = vunpack.c.l.b16 %v2070
    %v2250 = vunpack.c.h.b16 %v2070
    %v2251 = vunpack.c.l.b16 %v2071
    %v2252 = vunpack.c.h.b16 %v2071
    %v2253 = vunpack.c.l.b16 %v2072
    %v2254 = vunpack.c.h.b16 %v2072
    %v2255 = vunpack.c.l.b16 %v2073
    %v2256 = vunpack.c.h.b16 %v2073
    %v2257 = vunpack.c.l.b16 %v2074
    %v2258 = vunpack.c.h.b16 %v2074
    %v2259 = vunpack.c.l.b16 %v2075
    %v2260 = vunpack.c.h.b16 %v2075
    %v2261 = vunpack.c.l.b16 %v2076
    %v2262 = vunpack.c.h.b16 %v2076
    %v2263 = vunpack.c.l.b16 %v2077
    %v2264 = vunpack.c.h.b16 %v2077
    %v2265 = vunpack.c.l.b16 %v2078
    %v2266 = vunpack.c.h.b16 %v2078
    %v2267 = vunpack.c.l.b16 %v2079
    %v2268 = vunpack.c.h.b16 %v2079
    %v2269 = vunpack.c.l.b16 %v2080
    %v2270 = vunpack.c.h.b16 %v2080
    %v2271 = vunpack.c.l.b16 %v2081
    %v2272 = vunpack.c.h.b16 %v2081
    %v2273 = vunpack.c.l.b16 %v2082
    %v2274 = vunpack.c.h.b16 %v2082
    %v2275 = vunpack.c.l.b16 %v2083
    %v2276 = vunpack.c.h.b16 %v2083
    %v2277 = vunpack.c.l.b16 %v2084
    %v2278 = vunpack.c.h.b16 %v2084
    %v2279 = vunpack.c.l.b16 %v2085
    %v2280 = vunpack.c.h.b16 %v2085
    %v2281 = vunpack.c.l.b16 %v2086
    %v2282 = vunpack.c.h.b16 %v2086
    %v2283 = vpack.c.b16 %v2219, %v2155
    %v2284 = vpack.c.b16 %v2220, %v2156
    %v2285 = vpack.c.b16 %v2221, %v2157
    %v2286 = vpack.c.b16 %v2222, %v2158
    %v2287 = vpack.c.b16 %v2223, %v2159
    %v2288 = vpack.c.b16 %v2224, %v2160
    %v2289 = vpack.c.b16 %v2225, %v2161
    %v2290 = vpack.c.b16 %v2226, %v2162
    %v2291 = vpack.c.b16 %v2227, %v2163
    %v2292 = vpack.c.b16 %v2228, %v2164
    %v2293 = vpack.c.b16 %v2229, %v2165
    %v2294 = vpack.c.b16 %v2230, %v2166
    %v2295 = vpack.c.b16 %v2231, %v2167
    %v2296 = vpack.c.b16 %v2232, %v2168
    %v2297 = vpack.c.b16 %v2233, %v2169
    %v2298 = vpack.c.b16 %v2234, %v2170
    %v2299 = vpack.c.b16 %v2235, %v2171
    %v2300 = vpack.c.b16 %v2236, %v2172
    %v2301 = vpack.c.b16 %v2237, %v2173
    %v2302 = vpack.c.b16 %v2238, %v2174
    %v2303 = vpack.c.b16 %v2239, %v2175
    %v2304 = vpack.c.b16 %v2240, %v2176
    %v2305 = vpack.c.b16 %v2241, %v2177
    %v2306 = vpack.c.b16 %v2242, %v2178
    %v2307 = vpack.c.b16 %v2243, %v2179
    %v2308 = vpack.c.b16 %v2244, %v2180
    %v2309 = vpack.c.b16 %v2245, %v2181
    %v2310 = vpack.c.b16 %v2246, %v2182
    %v2311 = vpack.c.b16 %v2247, %v2183
    %v2312 = vpack.c.b16 %v2248, %v2184
    %v2313 = vpack.c.b16 %v2249, %v2185
    %v2314 = vpack.c.b16 %v2250, %v2186
    %v2315 = vpack.c.b16 %v2251, %v2187
    %v2316 = vpack.c.b16 %v2252, %v2188
    %v2317 = vpack.c.b16 %v2253, %v2189
    %v2318 = vpack.c.b16 %v2254, %v2190
    %v2319 = vpack.c.b16 %v2255, %v2191
    %v2320 = vpack.c.b16 %v2256, %v2192
    %v2321 = vpack.c.b16 %v2257, %v2193
    %v2322 = vpack.c.b16 %v2258, %v2194
    %v2323 = vpack.c.b16 %v2259, %v2195
    %v2324 = vpack.c.b16 %v2260, %v2196
    %v2325 = vpack.c.b16 %v2261, %v2197
    %v2326 = vpack.c.b16 %v2262, %v2198
    %v2327 = vpack.c.b16 %v2263, %v2199
    %v2328 = vpack.c.b16 %v2264, %v2200
    %v2329 = vpack.c.b16 %v2265, %v2201
    %v2330 = vpack.c.b16 %v2266, %v2202
    %v2331 = vpack.c.b16 %v2267, %v2203
    %v2332 = vpack.c.b16 %v2268, %v2204
    %v2333 = vpack.c.b16 %v2269, %v2205
    %v2334 = vpack.c.b16 %v2270, %v2206
    %v2335 = vpack.c.b16 %v2271, %v2207
    %v2336 = vpack.c.b16 %v2272, %v2208
    %v2337 = vpack.c.b16 %v2273, %v2209
    %v2338 = vpack.c.b16 %v2274, %v2210
    %v2339 = vpack.c.b16 %v2275, %v2211
    %v2340 = vpack.c.b16 %v2276, %v2212
    %v2341 = vpack.c.b16 %v2277, %v2213
    %v2342 = vpack.c.b16 %v2278, %v2214
    %v2343 = vpack.c.b16 %v2279, %v2215
    %v2344 = vpack.c.b16 %v2280, %v2216
    %v2345 = vpack.c.b16 %v2281, %v2217
    %v2346 = vpack.c.b16 %v2282, %v2218
    %2411 = vmatpush.bf16.xpose.msra.mxu0 0
    %2412 = vmatpush.bf16.xpose.msra.mxu0 0
    %2413 = vmatpush.bf16.xpose.msra.mxu0 0
    %2414 = vmatpush.bf16.xpose.msra.mxu0 0
    %2415 = vmatpush.bf16.xpose.msra.mxu0 0
    %2416 = vmatpush.bf16.xpose.msra.mxu0 0
    %2417 = vmatpush.bf16.xpose.msra.mxu0 0
    %2418 = vmatpush.bf16.xpose.msra.mxu0 %v2283
    %2419 = vmatmul.bf16.gmra.mxu0 %v1959
    %v2420 = vpop.f32.mrf.mxu0
    %v2421 = vadd.f32 %v2089, %v2420
    %v2422 = vpop.f32.mrf.mxu0
    %2423 = vdwg.mxu0
    %2424 = vmatpush.bf16.xpose.msra.mxu0 0
    %2425 = vmatpush.bf16.xpose.msra.mxu0 0
    %2426 = vmatpush.bf16.xpose.msra.mxu0 0
    %2427 = vmatpush.bf16.xpose.msra.mxu0 0
    %2428 = vmatpush.bf16.xpose.msra.mxu0 0
    %2429 = vmatpush.bf16.xpose.msra.mxu0 0
    %2430 = vmatpush.bf16.xpose.msra.mxu0 0
    %2431 = vmatpush.bf16.xpose.msra.mxu0 %v2284
    %2432 = vmatmul.bf16.gmra.mxu0 %v1960
    %v2433 = vpop.f32.mrf.mxu0
    %v2434 = vadd.f32 %v2421, %v2433
    %v2435 = vpop.f32.mrf.mxu0
    %2436 = vdwg.mxu0
    %2437 = vmatpush.bf16.xpose.msra.mxu0 0
    %2438 = vmatpush.bf16.xpose.msra.mxu0 0
    %2439 = vmatpush.bf16.xpose.msra.mxu0 0
    %2440 = vmatpush.bf16.xpose.msra.mxu0 0
    %2441 = vmatpush.bf16.xpose.msra.mxu0 0
    %2442 = vmatpush.bf16.xpose.msra.mxu0 0
    %2443 = vmatpush.bf16.xpose.msra.mxu0 0
    %2444 = vmatpush.bf16.xpose.msra.mxu0 %v2285
    %2445 = vmatmul.bf16.gmra.mxu0 %v1961
    %v2446 = vpop.f32.mrf.mxu0
    %v2447 = vadd.f32 %v2434, %v2446
    %v2448 = vpop.f32.mrf.mxu0
    %2449 = vdwg.mxu0
    %2450 = vmatpush.bf16.xpose.msra.mxu0 0
    %2451 = vmatpush.bf16.xpose.msra.mxu0 0
    %2452 = vmatpush.bf16.xpose.msra.mxu0 0
    %2453 = vmatpush.bf16.xpose.msra.mxu0 0
    %2454 = vmatpush.bf16.xpose.msra.mxu0 0
    %2455 = vmatpush.bf16.xpose.msra.mxu0 0
    %2456 = vmatpush.bf16.xpose.msra.mxu0 0
    %2457 = vmatpush.bf16.xpose.msra.mxu0 %v2286
    %2458 = vmatmul.bf16.gmra.mxu0 %v1962
    %v2459 = vpop.f32.mrf.mxu0
    %v2460 = vadd.f32 %v2447, %v2459
    %v2461 = vpop.f32.mrf.mxu0
    %2462 = vdwg.mxu0
    %2463 = vmatpush.bf16.xpose.msra.mxu0 0
    %2464 = vmatpush.bf16.xpose.msra.mxu0 0
    %2465 = vmatpush.bf16.xpose.msra.mxu0 0
    %2466 = vmatpush.bf16.xpose.msra.mxu0 0
    %2467 = vmatpush.bf16.xpose.msra.mxu0 0
    %2468 = vmatpush.bf16.xpose.msra.mxu0 0
    %2469 = vmatpush.bf16.xpose.msra.mxu0 0
    %2470 = vmatpush.bf16.xpose.msra.mxu0 %v2287
    %2471 = vmatmul.bf16.gmra.mxu0 %v1963
    %v2472 = vpop.f32.mrf.mxu0
    %v2473 = vadd.f32 %v2460, %v2472
    %v2474 = vpop.f32.mrf.mxu0
    %2475 = vdwg.mxu0
    %2476 = vmatpush.bf16.xpose.msra.mxu0 0
    %2477 = vmatpush.bf16.xpose.msra.mxu0 0
    %2478 = vmatpush.bf16.xpose.msra.mxu0 0
    %2479 = vmatpush.bf16.xpose.msra.mxu0 0
    %2480 = vmatpush.bf16.xpose.msra.mxu0 0
    %2481 = vmatpush.bf16.xpose.msra.mxu0 0
    %2482 = vmatpush.bf16.xpose.msra.mxu0 0
    %2483 = vmatpush.bf16.xpose.msra.mxu0 %v2288
    %2484 = vmatmul.bf16.gmra.mxu0 %v1964
    %v2485 = vpop.f32.mrf.mxu0
    %v2486 = vadd.f32 %v2473, %v2485
    %v2487 = vpop.f32.mrf.mxu0
    %2488 = vdwg.mxu0
    %2489 = vmatpush.bf16.xpose.msra.mxu0 0
    %2490 = vmatpush.bf16.xpose.msra.mxu0 0
    %2491 = vmatpush.bf16.xpose.msra.mxu0 0
    %2492 = vmatpush.bf16.xpose.msra.mxu0 0
    %2493 = vmatpush.bf16.xpose.msra.mxu0 0
    %2494 = vmatpush.bf16.xpose.msra.mxu0 0
    %2495 = vmatpush.bf16.xpose.msra.mxu0 0
    %2496 = vmatpush.bf16.xpose.msra.mxu0 %v2289
    %2497 = vmatmul.bf16.gmra.mxu0 %v1965
    %v2498 = vpop.f32.mrf.mxu0
    %v2499 = vadd.f32 %v2486, %v2498
    %v2500 = vpop.f32.mrf.mxu0
    %2501 = vdwg.mxu0
    %2502 = vmatpush.bf16.xpose.msra.mxu0 0
    %2503 = vmatpush.bf16.xpose.msra.mxu0 0
    %2504 = vmatpush.bf16.xpose.msra.mxu0 0
    %2505 = vmatpush.bf16.xpose.msra.mxu0 0
    %2506 = vmatpush.bf16.xpose.msra.mxu0 0
    %2507 = vmatpush.bf16.xpose.msra.mxu0 0
    %2508 = vmatpush.bf16.xpose.msra.mxu0 0
    %2509 = vmatpush.bf16.xpose.msra.mxu0 %v2290
    %2510 = vmatmul.bf16.gmra.mxu0 %v1966
    %v2511 = vpop.f32.mrf.mxu0
    %v2512 = vadd.f32 %v2499, %v2511
    %v2513 = vpop.f32.mrf.mxu0
    %2514 = vdwg.mxu0
    %2515 = vmatpush.bf16.xpose.msra.mxu0 0
    %2516 = vmatpush.bf16.xpose.msra.mxu0 0
    %2517 = vmatpush.bf16.xpose.msra.mxu0 0
    %2518 = vmatpush.bf16.xpose.msra.mxu0 0
    %2519 = vmatpush.bf16.xpose.msra.mxu0 0
    %2520 = vmatpush.bf16.xpose.msra.mxu0 0
    %2521 = vmatpush.bf16.xpose.msra.mxu0 0
    %2522 = vmatpush.bf16.xpose.msra.mxu0 %v2291
    %2523 = vmatmul.bf16.gmra.mxu0 %v1967
    %v2524 = vpop.f32.mrf.mxu0
    %v2525 = vadd.f32 %v2512, %v2524
    %v2526 = vpop.f32.mrf.mxu0
    %2527 = vdwg.mxu0
    %2528 = vmatpush.bf16.xpose.msra.mxu0 0
    %2529 = vmatpush.bf16.xpose.msra.mxu0 0
    %2530 = vmatpush.bf16.xpose.msra.mxu0 0
    %2531 = vmatpush.bf16.xpose.msra.mxu0 0
    %2532 = vmatpush.bf16.xpose.msra.mxu0 0
    %2533 = vmatpush.bf16.xpose.msra.mxu0 0
    %2534 = vmatpush.bf16.xpose.msra.mxu0 0
    %2535 = vmatpush.bf16.xpose.msra.mxu0 %v2292
    %2536 = vmatmul.bf16.gmra.mxu0 %v1968
    %v2537 = vpop.f32.mrf.mxu0
    %v2538 = vadd.f32 %v2525, %v2537
    %v2539 = vpop.f32.mrf.mxu0
    %2540 = vdwg.mxu0
    %2541 = vmatpush.bf16.xpose.msra.mxu0 0
    %2542 = vmatpush.bf16.xpose.msra.mxu0 0
    %2543 = vmatpush.bf16.xpose.msra.mxu0 0
    %2544 = vmatpush.bf16.xpose.msra.mxu0 0
    %2545 = vmatpush.bf16.xpose.msra.mxu0 0
    %2546 = vmatpush.bf16.xpose.msra.mxu0 0
    %2547 = vmatpush.bf16.xpose.msra.mxu0 0
    %2548 = vmatpush.bf16.xpose.msra.mxu0 %v2293
    %2549 = vmatmul.bf16.gmra.mxu0 %v1969
    %v2550 = vpop.f32.mrf.mxu0
    %v2551 = vadd.f32 %v2538, %v2550
    %v2552 = vpop.f32.mrf.mxu0
    %2553 = vdwg.mxu0
    %2554 = vmatpush.bf16.xpose.msra.mxu0 0
    %2555 = vmatpush.bf16.xpose.msra.mxu0 0
    %2556 = vmatpush.bf16.xpose.msra.mxu0 0
    %2557 = vmatpush.bf16.xpose.msra.mxu0 0
    %2558 = vmatpush.bf16.xpose.msra.mxu0 0
    %2559 = vmatpush.bf16.xpose.msra.mxu0 0
    %2560 = vmatpush.bf16.xpose.msra.mxu0 0
    %2561 = vmatpush.bf16.xpose.msra.mxu0 %v2294
    %2562 = vmatmul.bf16.gmra.mxu0 %v1970
    %v2563 = vpop.f32.mrf.mxu0
    %v2564 = vadd.f32 %v2551, %v2563
    %v2565 = vpop.f32.mrf.mxu0
    %2566 = vdwg.mxu0
    %2567 = vmatpush.bf16.xpose.msra.mxu0 0
    %2568 = vmatpush.bf16.xpose.msra.mxu0 0
    %2569 = vmatpush.bf16.xpose.msra.mxu0 0
    %2570 = vmatpush.bf16.xpose.msra.mxu0 0
    %2571 = vmatpush.bf16.xpose.msra.mxu0 0
    %2572 = vmatpush.bf16.xpose.msra.mxu0 0
    %2573 = vmatpush.bf16.xpose.msra.mxu0 0
    %2574 = vmatpush.bf16.xpose.msra.mxu0 %v2295
    %2575 = vmatmul.bf16.gmra.mxu0 %v1971
    %v2576 = vpop.f32.mrf.mxu0
    %v2577 = vadd.f32 %v2564, %v2576
    %v2578 = vpop.f32.mrf.mxu0
    %2579 = vdwg.mxu0
    %2580 = vmatpush.bf16.xpose.msra.mxu0 0
    %2581 = vmatpush.bf16.xpose.msra.mxu0 0
    %2582 = vmatpush.bf16.xpose.msra.mxu0 0
    %2583 = vmatpush.bf16.xpose.msra.mxu0 0
    %2584 = vmatpush.bf16.xpose.msra.mxu0 0
    %2585 = vmatpush.bf16.xpose.msra.mxu0 0
    %2586 = vmatpush.bf16.xpose.msra.mxu0 0
    %2587 = vmatpush.bf16.xpose.msra.mxu0 %v2296
    %2588 = vmatmul.bf16.gmra.mxu0 %v1972
    %v2589 = vpop.f32.mrf.mxu0
    %v2590 = vadd.f32 %v2577, %v2589
    %v2591 = vpop.f32.mrf.mxu0
    %2592 = vdwg.mxu0
    %2593 = vmatpush.bf16.xpose.msra.mxu0 0
    %2594 = vmatpush.bf16.xpose.msra.mxu0 0
    %2595 = vmatpush.bf16.xpose.msra.mxu0 0
    %2596 = vmatpush.bf16.xpose.msra.mxu0 0
    %2597 = vmatpush.bf16.xpose.msra.mxu0 0
    %2598 = vmatpush.bf16.xpose.msra.mxu0 0
    %2599 = vmatpush.bf16.xpose.msra.mxu0 0
    %2600 = vmatpush.bf16.xpose.msra.mxu0 %v2297
    %2601 = vmatmul.bf16.gmra.mxu0 %v1973
    %v2602 = vpop.f32.mrf.mxu0
    %v2603 = vadd.f32 %v2590, %v2602
    %v2604 = vpop.f32.mrf.mxu0
    %2605 = vdwg.mxu0
    %2606 = vmatpush.bf16.xpose.msra.mxu0 0
    %2607 = vmatpush.bf16.xpose.msra.mxu0 0
    %2608 = vmatpush.bf16.xpose.msra.mxu0 0
    %2609 = vmatpush.bf16.xpose.msra.mxu0 0
    %2610 = vmatpush.bf16.xpose.msra.mxu0 0
    %2611 = vmatpush.bf16.xpose.msra.mxu0 0
    %2612 = vmatpush.bf16.xpose.msra.mxu0 0
    %2613 = vmatpush.bf16.xpose.msra.mxu0 %v2298
    %2614 = vmatmul.bf16.gmra.mxu0 %v1974
    %v2615 = vpop.f32.mrf.mxu0
    %v2616 = vadd.f32 %v2603, %v2615
    %v2617 = vpop.f32.mrf.mxu0
    %2618 = vdwg.mxu0
    %2619 = vmatpush.bf16.xpose.msra.mxu0 0
    %2620 = vmatpush.bf16.xpose.msra.mxu0 0
    %2621 = vmatpush.bf16.xpose.msra.mxu0 0
    %2622 = vmatpush.bf16.xpose.msra.mxu0 0
    %2623 = vmatpush.bf16.xpose.msra.mxu0 0
    %2624 = vmatpush.bf16.xpose.msra.mxu0 0
    %2625 = vmatpush.bf16.xpose.msra.mxu0 0
    %2626 = vmatpush.bf16.xpose.msra.mxu0 %v2299
    %2627 = vmatmul.bf16.gmra.mxu0 %v1975
    %v2628 = vpop.f32.mrf.mxu0
    %v2629 = vadd.f32 %v2616, %v2628
    %v2630 = vpop.f32.mrf.mxu0
    %2631 = vdwg.mxu0
    %2632 = vmatpush.bf16.xpose.msra.mxu0 0
    %2633 = vmatpush.bf16.xpose.msra.mxu0 0
    %2634 = vmatpush.bf16.xpose.msra.mxu0 0
    %2635 = vmatpush.bf16.xpose.msra.mxu0 0
    %2636 = vmatpush.bf16.xpose.msra.mxu0 0
    %2637 = vmatpush.bf16.xpose.msra.mxu0 0
    %2638 = vmatpush.bf16.xpose.msra.mxu0 0
    %2639 = vmatpush.bf16.xpose.msra.mxu0 %v2300
    %2640 = vmatmul.bf16.gmra.mxu0 %v1976
    %v2641 = vpop.f32.mrf.mxu0
    %v2642 = vadd.f32 %v2629, %v2641
    %v2643 = vpop.f32.mrf.mxu0
    %2644 = vdwg.mxu0
    %2645 = vmatpush.bf16.xpose.msra.mxu0 0
    %2646 = vmatpush.bf16.xpose.msra.mxu0 0
    %2647 = vmatpush.bf16.xpose.msra.mxu0 0
    %2648 = vmatpush.bf16.xpose.msra.mxu0 0
    %2649 = vmatpush.bf16.xpose.msra.mxu0 0
    %2650 = vmatpush.bf16.xpose.msra.mxu0 0
    %2651 = vmatpush.bf16.xpose.msra.mxu0 0
    %2652 = vmatpush.bf16.xpose.msra.mxu0 %v2301
    %2653 = vmatmul.bf16.gmra.mxu0 %v1977
    %v2654 = vpop.f32.mrf.mxu0
    %v2655 = vadd.f32 %v2642, %v2654
    %v2656 = vpop.f32.mrf.mxu0
    %2657 = vdwg.mxu0
    %2658 = vmatpush.bf16.xpose.msra.mxu0 0
    %2659 = vmatpush.bf16.xpose.msra.mxu0 0
    %2660 = vmatpush.bf16.xpose.msra.mxu0 0
    %2661 = vmatpush.bf16.xpose.msra.mxu0 0
    %2662 = vmatpush.bf16.xpose.msra.mxu0 0
    %2663 = vmatpush.bf16.xpose.msra.mxu0 0
    %2664 = vmatpush.bf16.xpose.msra.mxu0 0
    %2665 = vmatpush.bf16.xpose.msra.mxu0 %v2302
    %2666 = vmatmul.bf16.gmra.mxu0 %v1978
    %v2667 = vpop.f32.mrf.mxu0
    %v2668 = vadd.f32 %v2655, %v2667
    %v2669 = vpop.f32.mrf.mxu0
    %2670 = vdwg.mxu0
    %2671 = vmatpush.bf16.xpose.msra.mxu0 0
    %2672 = vmatpush.bf16.xpose.msra.mxu0 0
    %2673 = vmatpush.bf16.xpose.msra.mxu0 0
    %2674 = vmatpush.bf16.xpose.msra.mxu0 0
    %2675 = vmatpush.bf16.xpose.msra.mxu0 0
    %2676 = vmatpush.bf16.xpose.msra.mxu0 0
    %2677 = vmatpush.bf16.xpose.msra.mxu0 0
    %2678 = vmatpush.bf16.xpose.msra.mxu0 %v2303
    %2679 = vmatmul.bf16.gmra.mxu0 %v1979
    %v2680 = vpop.f32.mrf.mxu0
    %v2681 = vadd.f32 %v2668, %v2680
    %v2682 = vpop.f32.mrf.mxu0
    %2683 = vdwg.mxu0
    %2684 = vmatpush.bf16.xpose.msra.mxu0 0
    %2685 = vmatpush.bf16.xpose.msra.mxu0 0
    %2686 = vmatpush.bf16.xpose.msra.mxu0 0
    %2687 = vmatpush.bf16.xpose.msra.mxu0 0
    %2688 = vmatpush.bf16.xpose.msra.mxu0 0
    %2689 = vmatpush.bf16.xpose.msra.mxu0 0
    %2690 = vmatpush.bf16.xpose.msra.mxu0 0
    %2691 = vmatpush.bf16.xpose.msra.mxu0 %v2304
    %2692 = vmatmul.bf16.gmra.mxu0 %v1980
    %v2693 = vpop.f32.mrf.mxu0
    %v2694 = vadd.f32 %v2681, %v2693
    %v2695 = vpop.f32.mrf.mxu0
    %2696 = vdwg.mxu0
    %2697 = vmatpush.bf16.xpose.msra.mxu0 0
    %2698 = vmatpush.bf16.xpose.msra.mxu0 0
    %2699 = vmatpush.bf16.xpose.msra.mxu0 0
    %2700 = vmatpush.bf16.xpose.msra.mxu0 0
    %2701 = vmatpush.bf16.xpose.msra.mxu0 0
    %2702 = vmatpush.bf16.xpose.msra.mxu0 0
    %2703 = vmatpush.bf16.xpose.msra.mxu0 0
    %2704 = vmatpush.bf16.xpose.msra.mxu0 %v2305
    %2705 = vmatmul.bf16.gmra.mxu0 %v1981
    %v2706 = vpop.f32.mrf.mxu0
    %v2707 = vadd.f32 %v2694, %v2706
    %v2708 = vpop.f32.mrf.mxu0
    %2709 = vdwg.mxu0
    %2710 = vmatpush.bf16.xpose.msra.mxu0 0
    %2711 = vmatpush.bf16.xpose.msra.mxu0 0
    %2712 = vmatpush.bf16.xpose.msra.mxu0 0
    %2713 = vmatpush.bf16.xpose.msra.mxu0 0
    %2714 = vmatpush.bf16.xpose.msra.mxu0 0
    %2715 = vmatpush.bf16.xpose.msra.mxu0 0
    %2716 = vmatpush.bf16.xpose.msra.mxu0 0
    %2717 = vmatpush.bf16.xpose.msra.mxu0 %v2306
    %2718 = vmatmul.bf16.gmra.mxu0 %v1982
    %v2719 = vpop.f32.mrf.mxu0
    %v2720 = vadd.f32 %v2707, %v2719
    %v2721 = vpop.f32.mrf.mxu0
    %2722 = vdwg.mxu0
    %2723 = vmatpush.bf16.xpose.msra.mxu0 0
    %2724 = vmatpush.bf16.xpose.msra.mxu0 0
    %2725 = vmatpush.bf16.xpose.msra.mxu0 0
    %2726 = vmatpush.bf16.xpose.msra.mxu0 0
    %2727 = vmatpush.bf16.xpose.msra.mxu0 0
    %2728 = vmatpush.bf16.xpose.msra.mxu0 0
    %2729 = vmatpush.bf16.xpose.msra.mxu0 0
    %2730 = vmatpush.bf16.xpose.msra.mxu0 %v2307
    %2731 = vmatmul.bf16.gmra.mxu0 %v1983
    %v2732 = vpop.f32.mrf.mxu0
    %v2733 = vadd.f32 %v2720, %v2732
    %v2734 = vpop.f32.mrf.mxu0
    %2735 = vdwg.mxu0
    %2736 = vmatpush.bf16.xpose.msra.mxu0 0
    %2737 = vmatpush.bf16.xpose.msra.mxu0 0
    %2738 = vmatpush.bf16.xpose.msra.mxu0 0
    %2739 = vmatpush.bf16.xpose.msra.mxu0 0
    %2740 = vmatpush.bf16.xpose.msra.mxu0 0
    %2741 = vmatpush.bf16.xpose.msra.mxu0 0
    %2742 = vmatpush.bf16.xpose.msra.mxu0 0
    %2743 = vmatpush.bf16.xpose.msra.mxu0 %v2308
    %2744 = vmatmul.bf16.gmra.mxu0 %v1984
    %v2745 = vpop.f32.mrf.mxu0
    %v2746 = vadd.f32 %v2733, %v2745
    %v2747 = vpop.f32.mrf.mxu0
    %2748 = vdwg.mxu0
    %2749 = vmatpush.bf16.xpose.msra.mxu0 0
    %2750 = vmatpush.bf16.xpose.msra.mxu0 0
    %2751 = vmatpush.bf16.xpose.msra.mxu0 0
    %2752 = vmatpush.bf16.xpose.msra.mxu0 0
    %2753 = vmatpush.bf16.xpose.msra.mxu0 0
    %2754 = vmatpush.bf16.xpose.msra.mxu0 0
    %2755 = vmatpush.bf16.xpose.msra.mxu0 0
    %2756 = vmatpush.bf16.xpose.msra.mxu0 %v2309
    %2757 = vmatmul.bf16.gmra.mxu0 %v1985
    %v2758 = vpop.f32.mrf.mxu0
    %v2759 = vadd.f32 %v2746, %v2758
    %v2760 = vpop.f32.mrf.mxu0
    %2761 = vdwg.mxu0
    %2762 = vmatpush.bf16.xpose.msra.mxu0 0
    %2763 = vmatpush.bf16.xpose.msra.mxu0 0
    %2764 = vmatpush.bf16.xpose.msra.mxu0 0
    %2765 = vmatpush.bf16.xpose.msra.mxu0 0
    %2766 = vmatpush.bf16.xpose.msra.mxu0 0
    %2767 = vmatpush.bf16.xpose.msra.mxu0 0
    %2768 = vmatpush.bf16.xpose.msra.mxu0 0
    %2769 = vmatpush.bf16.xpose.msra.mxu0 %v2310
    %2770 = vmatmul.bf16.gmra.mxu0 %v1986
    %v2771 = vpop.f32.mrf.mxu0
    %v2772 = vadd.f32 %v2759, %v2771
    %v2773 = vpop.f32.mrf.mxu0
    %2774 = vdwg.mxu0
    %2775 = vmatpush.bf16.xpose.msra.mxu0 0
    %2776 = vmatpush.bf16.xpose.msra.mxu0 0
    %2777 = vmatpush.bf16.xpose.msra.mxu0 0
    %2778 = vmatpush.bf16.xpose.msra.mxu0 0
    %2779 = vmatpush.bf16.xpose.msra.mxu0 0
    %2780 = vmatpush.bf16.xpose.msra.mxu0 0
    %2781 = vmatpush.bf16.xpose.msra.mxu0 0
    %2782 = vmatpush.bf16.xpose.msra.mxu0 %v2311
    %2783 = vmatmul.bf16.gmra.mxu0 %v1987
    %v2784 = vpop.f32.mrf.mxu0
    %v2785 = vadd.f32 %v2772, %v2784
    %v2786 = vpop.f32.mrf.mxu0
    %2787 = vdwg.mxu0
    %2788 = vmatpush.bf16.xpose.msra.mxu0 0
    %2789 = vmatpush.bf16.xpose.msra.mxu0 0
    %2790 = vmatpush.bf16.xpose.msra.mxu0 0
    %2791 = vmatpush.bf16.xpose.msra.mxu0 0
    %2792 = vmatpush.bf16.xpose.msra.mxu0 0
    %2793 = vmatpush.bf16.xpose.msra.mxu0 0
    %2794 = vmatpush.bf16.xpose.msra.mxu0 0
    %2795 = vmatpush.bf16.xpose.msra.mxu0 %v2312
    %2796 = vmatmul.bf16.gmra.mxu0 %v1988
    %v2797 = vpop.f32.mrf.mxu0
    %v2798 = vadd.f32 %v2785, %v2797
    %v2799 = vpop.f32.mrf.mxu0
    %2800 = vdwg.mxu0
    %2801 = vmatpush.bf16.xpose.msra.mxu0 0
    %2802 = vmatpush.bf16.xpose.msra.mxu0 0
    %2803 = vmatpush.bf16.xpose.msra.mxu0 0
    %2804 = vmatpush.bf16.xpose.msra.mxu0 0
    %2805 = vmatpush.bf16.xpose.msra.mxu0 0
    %2806 = vmatpush.bf16.xpose.msra.mxu0 0
    %2807 = vmatpush.bf16.xpose.msra.mxu0 0
    %2808 = vmatpush.bf16.xpose.msra.mxu0 %v2313
    %2809 = vmatmul.bf16.gmra.mxu0 %v1989
    %v2810 = vpop.f32.mrf.mxu0
    %v2811 = vadd.f32 %v2798, %v2810
    %v2812 = vpop.f32.mrf.mxu0
    %2813 = vdwg.mxu0
    %2814 = vmatpush.bf16.xpose.msra.mxu0 0
    %2815 = vmatpush.bf16.xpose.msra.mxu0 0
    %2816 = vmatpush.bf16.xpose.msra.mxu0 0
    %2817 = vmatpush.bf16.xpose.msra.mxu0 0
    %2818 = vmatpush.bf16.xpose.msra.mxu0 0
    %2819 = vmatpush.bf16.xpose.msra.mxu0 0
    %2820 = vmatpush.bf16.xpose.msra.mxu0 0
    %2821 = vmatpush.bf16.xpose.msra.mxu0 %v2314
    %2822 = vmatmul.bf16.gmra.mxu0 %v1990
    %v2823 = vpop.f32.mrf.mxu0
    %v2824 = vadd.f32 %v2811, %v2823
    %v2825 = vpop.f32.mrf.mxu0
    %2826 = vdwg.mxu0
    %2827 = vmatpush.bf16.xpose.msra.mxu0 0
    %2828 = vmatpush.bf16.xpose.msra.mxu0 0
    %2829 = vmatpush.bf16.xpose.msra.mxu0 0
    %2830 = vmatpush.bf16.xpose.msra.mxu0 0
    %2831 = vmatpush.bf16.xpose.msra.mxu0 0
    %2832 = vmatpush.bf16.xpose.msra.mxu0 0
    %2833 = vmatpush.bf16.xpose.msra.mxu0 0
    %2834 = vmatpush.bf16.xpose.msra.mxu0 %v2315
    %2835 = vmatmul.bf16.gmra.mxu0 %v1991
    %v2836 = vpop.f32.mrf.mxu0
    %v2837 = vadd.f32 %v2824, %v2836
    %v2838 = vpop.f32.mrf.mxu0
    %2839 = vdwg.mxu0
    %2840 = vmatpush.bf16.xpose.msra.mxu0 0
    %2841 = vmatpush.bf16.xpose.msra.mxu0 0
    %2842 = vmatpush.bf16.xpose.msra.mxu0 0
    %2843 = vmatpush.bf16.xpose.msra.mxu0 0
    %2844 = vmatpush.bf16.xpose.msra.mxu0 0
    %2845 = vmatpush.bf16.xpose.msra.mxu0 0
    %2846 = vmatpush.bf16.xpose.msra.mxu0 0
    %2847 = vmatpush.bf16.xpose.msra.mxu0 %v2316
    %2848 = vmatmul.bf16.gmra.mxu0 %v1992
    %v2849 = vpop.f32.mrf.mxu0
    %v2850 = vadd.f32 %v2837, %v2849
    %v2851 = vpop.f32.mrf.mxu0
    %2852 = vdwg.mxu0
    %2853 = vmatpush.bf16.xpose.msra.mxu0 0
    %2854 = vmatpush.bf16.xpose.msra.mxu0 0
    %2855 = vmatpush.bf16.xpose.msra.mxu0 0
    %2856 = vmatpush.bf16.xpose.msra.mxu0 0
    %2857 = vmatpush.bf16.xpose.msra.mxu0 0
    %2858 = vmatpush.bf16.xpose.msra.mxu0 0
    %2859 = vmatpush.bf16.xpose.msra.mxu0 0
    %2860 = vmatpush.bf16.xpose.msra.mxu0 %v2317
    %2861 = vmatmul.bf16.gmra.mxu0 %v1993
    %v2862 = vpop.f32.mrf.mxu0
    %v2863 = vadd.f32 %v2850, %v2862
    %v2864 = vpop.f32.mrf.mxu0
    %2865 = vdwg.mxu0
    %2866 = vmatpush.bf16.xpose.msra.mxu0 0
    %2867 = vmatpush.bf16.xpose.msra.mxu0 0
    %2868 = vmatpush.bf16.xpose.msra.mxu0 0
    %2869 = vmatpush.bf16.xpose.msra.mxu0 0
    %2870 = vmatpush.bf16.xpose.msra.mxu0 0
    %2871 = vmatpush.bf16.xpose.msra.mxu0 0
    %2872 = vmatpush.bf16.xpose.msra.mxu0 0
    %2873 = vmatpush.bf16.xpose.msra.mxu0 %v2318
    %2874 = vmatmul.bf16.gmra.mxu0 %v1994
    %v2875 = vpop.f32.mrf.mxu0
    %v2876 = vadd.f32 %v2863, %v2875
    %v2877 = vpop.f32.mrf.mxu0
    %2878 = vdwg.mxu0
    %2879 = vmatpush.bf16.xpose.msra.mxu0 0
    %2880 = vmatpush.bf16.xpose.msra.mxu0 0
    %2881 = vmatpush.bf16.xpose.msra.mxu0 0
    %2882 = vmatpush.bf16.xpose.msra.mxu0 0
    %2883 = vmatpush.bf16.xpose.msra.mxu0 0
    %2884 = vmatpush.bf16.xpose.msra.mxu0 0
    %2885 = vmatpush.bf16.xpose.msra.mxu0 0
    %2886 = vmatpush.bf16.xpose.msra.mxu0 %v2319
    %2887 = vmatmul.bf16.gmra.mxu0 %v1995
    %v2888 = vpop.f32.mrf.mxu0
    %v2889 = vadd.f32 %v2876, %v2888
    %v2890 = vpop.f32.mrf.mxu0
    %2891 = vdwg.mxu0
    %2892 = vmatpush.bf16.xpose.msra.mxu0 0
    %2893 = vmatpush.bf16.xpose.msra.mxu0 0
    %2894 = vmatpush.bf16.xpose.msra.mxu0 0
    %2895 = vmatpush.bf16.xpose.msra.mxu0 0
    %2896 = vmatpush.bf16.xpose.msra.mxu0 0
    %2897 = vmatpush.bf16.xpose.msra.mxu0 0
    %2898 = vmatpush.bf16.xpose.msra.mxu0 0
    %2899 = vmatpush.bf16.xpose.msra.mxu0 %v2320
    %2900 = vmatmul.bf16.gmra.mxu0 %v1996
    %v2901 = vpop.f32.mrf.mxu0
    %v2902 = vadd.f32 %v2889, %v2901
    %v2903 = vpop.f32.mrf.mxu0
    %2904 = vdwg.mxu0
    %2905 = vmatpush.bf16.xpose.msra.mxu0 0
    %2906 = vmatpush.bf16.xpose.msra.mxu0 0
    %2907 = vmatpush.bf16.xpose.msra.mxu0 0
    %2908 = vmatpush.bf16.xpose.msra.mxu0 0
    %2909 = vmatpush.bf16.xpose.msra.mxu0 0
    %2910 = vmatpush.bf16.xpose.msra.mxu0 0
    %2911 = vmatpush.bf16.xpose.msra.mxu0 0
    %2912 = vmatpush.bf16.xpose.msra.mxu0 %v2321
    %2913 = vmatmul.bf16.gmra.mxu0 %v1997
    %v2914 = vpop.f32.mrf.mxu0
    %v2915 = vadd.f32 %v2902, %v2914
    %v2916 = vpop.f32.mrf.mxu0
    %2917 = vdwg.mxu0
    %2918 = vmatpush.bf16.xpose.msra.mxu0 0
    %2919 = vmatpush.bf16.xpose.msra.mxu0 0
    %2920 = vmatpush.bf16.xpose.msra.mxu0 0
    %2921 = vmatpush.bf16.xpose.msra.mxu0 0
    %2922 = vmatpush.bf16.xpose.msra.mxu0 0
    %2923 = vmatpush.bf16.xpose.msra.mxu0 0
    %2924 = vmatpush.bf16.xpose.msra.mxu0 0
    %2925 = vmatpush.bf16.xpose.msra.mxu0 %v2322
    %2926 = vmatmul.bf16.gmra.mxu0 %v1998
    %v2927 = vpop.f32.mrf.mxu0
    %v2928 = vadd.f32 %v2915, %v2927
    %v2929 = vpop.f32.mrf.mxu0
    %2930 = vdwg.mxu0
    %2931 = vmatpush.bf16.xpose.msra.mxu0 0
    %2932 = vmatpush.bf16.xpose.msra.mxu0 0
    %2933 = vmatpush.bf16.xpose.msra.mxu0 0
    %2934 = vmatpush.bf16.xpose.msra.mxu0 0
    %2935 = vmatpush.bf16.xpose.msra.mxu0 0
    %2936 = vmatpush.bf16.xpose.msra.mxu0 0
    %2937 = vmatpush.bf16.xpose.msra.mxu0 0
    %2938 = vmatpush.bf16.xpose.msra.mxu0 %v2323
    %2939 = vmatmul.bf16.gmra.mxu0 %v1999
    %v2940 = vpop.f32.mrf.mxu0
    %v2941 = vadd.f32 %v2928, %v2940
    %v2942 = vpop.f32.mrf.mxu0
    %2943 = vdwg.mxu0
    %2944 = vmatpush.bf16.xpose.msra.mxu0 0
    %2945 = vmatpush.bf16.xpose.msra.mxu0 0
    %2946 = vmatpush.bf16.xpose.msra.mxu0 0
    %2947 = vmatpush.bf16.xpose.msra.mxu0 0
    %2948 = vmatpush.bf16.xpose.msra.mxu0 0
    %2949 = vmatpush.bf16.xpose.msra.mxu0 0
    %2950 = vmatpush.bf16.xpose.msra.mxu0 0
    %2951 = vmatpush.bf16.xpose.msra.mxu0 %v2324
    %2952 = vmatmul.bf16.gmra.mxu0 %v2000
    %v2953 = vpop.f32.mrf.mxu0
    %v2954 = vadd.f32 %v2941, %v2953
    %v2955 = vpop.f32.mrf.mxu0
    %2956 = vdwg.mxu0
    %2957 = vmatpush.bf16.xpose.msra.mxu0 0
    %2958 = vmatpush.bf16.xpose.msra.mxu0 0
    %2959 = vmatpush.bf16.xpose.msra.mxu0 0
    %2960 = vmatpush.bf16.xpose.msra.mxu0 0
    %2961 = vmatpush.bf16.xpose.msra.mxu0 0
    %2962 = vmatpush.bf16.xpose.msra.mxu0 0
    %2963 = vmatpush.bf16.xpose.msra.mxu0 0
    %2964 = vmatpush.bf16.xpose.msra.mxu0 %v2325
    %2965 = vmatmul.bf16.gmra.mxu0 %v2001
    %v2966 = vpop.f32.mrf.mxu0
    %v2967 = vadd.f32 %v2954, %v2966
    %v2968 = vpop.f32.mrf.mxu0
    %2969 = vdwg.mxu0
    %2970 = vmatpush.bf16.xpose.msra.mxu0 0
    %2971 = vmatpush.bf16.xpose.msra.mxu0 0
    %2972 = vmatpush.bf16.xpose.msra.mxu0 0
    %2973 = vmatpush.bf16.xpose.msra.mxu0 0
    %2974 = vmatpush.bf16.xpose.msra.mxu0 0
    %2975 = vmatpush.bf16.xpose.msra.mxu0 0
    %2976 = vmatpush.bf16.xpose.msra.mxu0 0
    %2977 = vmatpush.bf16.xpose.msra.mxu0 %v2326
    %2978 = vmatmul.bf16.gmra.mxu0 %v2002
    %v2979 = vpop.f32.mrf.mxu0
    %v2980 = vadd.f32 %v2967, %v2979
    %v2981 = vpop.f32.mrf.mxu0
    %2982 = vdwg.mxu0
    %2983 = vmatpush.bf16.xpose.msra.mxu0 0
    %2984 = vmatpush.bf16.xpose.msra.mxu0 0
    %2985 = vmatpush.bf16.xpose.msra.mxu0 0
    %2986 = vmatpush.bf16.xpose.msra.mxu0 0
    %2987 = vmatpush.bf16.xpose.msra.mxu0 0
    %2988 = vmatpush.bf16.xpose.msra.mxu0 0
    %2989 = vmatpush.bf16.xpose.msra.mxu0 0
    %2990 = vmatpush.bf16.xpose.msra.mxu0 %v2327
    %2991 = vmatmul.bf16.gmra.mxu0 %v2003
    %v2992 = vpop.f32.mrf.mxu0
    %v2993 = vadd.f32 %v2980, %v2992
    %v2994 = vpop.f32.mrf.mxu0
    %2995 = vdwg.mxu0
    %2996 = vmatpush.bf16.xpose.msra.mxu0 0
    %2997 = vmatpush.bf16.xpose.msra.mxu0 0
    %2998 = vmatpush.bf16.xpose.msra.mxu0 0
    %2999 = vmatpush.bf16.xpose.msra.mxu0 0
    %3000 = vmatpush.bf16.xpose.msra.mxu0 0
    %3001 = vmatpush.bf16.xpose.msra.mxu0 0
    %3002 = vmatpush.bf16.xpose.msra.mxu0 0
    %3003 = vmatpush.bf16.xpose.msra.mxu0 %v2328
    %3004 = vmatmul.bf16.gmra.mxu0 %v2004
    %v3005 = vpop.f32.mrf.mxu0
    %v3006 = vadd.f32 %v2993, %v3005
    %v3007 = vpop.f32.mrf.mxu0
    %3008 = vdwg.mxu0
    %3009 = vmatpush.bf16.xpose.msra.mxu0 0
    %3010 = vmatpush.bf16.xpose.msra.mxu0 0
    %3011 = vmatpush.bf16.xpose.msra.mxu0 0
    %3012 = vmatpush.bf16.xpose.msra.mxu0 0
    %3013 = vmatpush.bf16.xpose.msra.mxu0 0
    %3014 = vmatpush.bf16.xpose.msra.mxu0 0
    %3015 = vmatpush.bf16.xpose.msra.mxu0 0
    %3016 = vmatpush.bf16.xpose.msra.mxu0 %v2329
    %3017 = vmatmul.bf16.gmra.mxu0 %v2005
    %v3018 = vpop.f32.mrf.mxu0
    %v3019 = vadd.f32 %v3006, %v3018
    %v3020 = vpop.f32.mrf.mxu0
    %3021 = vdwg.mxu0
    %3022 = vmatpush.bf16.xpose.msra.mxu0 0
    %3023 = vmatpush.bf16.xpose.msra.mxu0 0
    %3024 = vmatpush.bf16.xpose.msra.mxu0 0
    %3025 = vmatpush.bf16.xpose.msra.mxu0 0
    %3026 = vmatpush.bf16.xpose.msra.mxu0 0
    %3027 = vmatpush.bf16.xpose.msra.mxu0 0
    %3028 = vmatpush.bf16.xpose.msra.mxu0 0
    %3029 = vmatpush.bf16.xpose.msra.mxu0 %v2330
    %3030 = vmatmul.bf16.gmra.mxu0 %v2006
    %v3031 = vpop.f32.mrf.mxu0
    %v3032 = vadd.f32 %v3019, %v3031
    %v3033 = vpop.f32.mrf.mxu0
    %3034 = vdwg.mxu0
    %3035 = vmatpush.bf16.xpose.msra.mxu0 0
    %3036 = vmatpush.bf16.xpose.msra.mxu0 0
    %3037 = vmatpush.bf16.xpose.msra.mxu0 0
    %3038 = vmatpush.bf16.xpose.msra.mxu0 0
    %3039 = vmatpush.bf16.xpose.msra.mxu0 0
    %3040 = vmatpush.bf16.xpose.msra.mxu0 0
    %3041 = vmatpush.bf16.xpose.msra.mxu0 0
    %3042 = vmatpush.bf16.xpose.msra.mxu0 %v2331
    %3043 = vmatmul.bf16.gmra.mxu0 %v2007
    %v3044 = vpop.f32.mrf.mxu0
    %v3045 = vadd.f32 %v3032, %v3044
    %v3046 = vpop.f32.mrf.mxu0
    %3047 = vdwg.mxu0
    %3048 = vmatpush.bf16.xpose.msra.mxu0 0
    %3049 = vmatpush.bf16.xpose.msra.mxu0 0
    %3050 = vmatpush.bf16.xpose.msra.mxu0 0
    %3051 = vmatpush.bf16.xpose.msra.mxu0 0
    %3052 = vmatpush.bf16.xpose.msra.mxu0 0
    %3053 = vmatpush.bf16.xpose.msra.mxu0 0
    %3054 = vmatpush.bf16.xpose.msra.mxu0 0
    %3055 = vmatpush.bf16.xpose.msra.mxu0 %v2332
    %3056 = vmatmul.bf16.gmra.mxu0 %v2008
    %v3057 = vpop.f32.mrf.mxu0
    %v3058 = vadd.f32 %v3045, %v3057
    %v3059 = vpop.f32.mrf.mxu0
    %3060 = vdwg.mxu0
    %3061 = vmatpush.bf16.xpose.msra.mxu0 0
    %3062 = vmatpush.bf16.xpose.msra.mxu0 0
    %3063 = vmatpush.bf16.xpose.msra.mxu0 0
    %3064 = vmatpush.bf16.xpose.msra.mxu0 0
    %3065 = vmatpush.bf16.xpose.msra.mxu0 0
    %3066 = vmatpush.bf16.xpose.msra.mxu0 0
    %3067 = vmatpush.bf16.xpose.msra.mxu0 0
    %3068 = vmatpush.bf16.xpose.msra.mxu0 %v2333
    %3069 = vmatmul.bf16.gmra.mxu0 %v2009
    %v3070 = vpop.f32.mrf.mxu0
    %v3071 = vadd.f32 %v3058, %v3070
    %v3072 = vpop.f32.mrf.mxu0
    %3073 = vdwg.mxu0
    %3074 = vmatpush.bf16.xpose.msra.mxu0 0
    %3075 = vmatpush.bf16.xpose.msra.mxu0 0
    %3076 = vmatpush.bf16.xpose.msra.mxu0 0
    %3077 = vmatpush.bf16.xpose.msra.mxu0 0
    %3078 = vmatpush.bf16.xpose.msra.mxu0 0
    %3079 = vmatpush.bf16.xpose.msra.mxu0 0
    %3080 = vmatpush.bf16.xpose.msra.mxu0 0
    %3081 = vmatpush.bf16.xpose.msra.mxu0 %v2334
    %3082 = vmatmul.bf16.gmra.mxu0 %v2010
    %v3083 = vpop.f32.mrf.mxu0
    %v3084 = vadd.f32 %v3071, %v3083
    %v3085 = vpop.f32.mrf.mxu0
    %3086 = vdwg.mxu0
    %3087 = vmatpush.bf16.xpose.msra.mxu0 0
    %3088 = vmatpush.bf16.xpose.msra.mxu0 0
    %3089 = vmatpush.bf16.xpose.msra.mxu0 0
    %3090 = vmatpush.bf16.xpose.msra.mxu0 0
    %3091 = vmatpush.bf16.xpose.msra.mxu0 0
    %3092 = vmatpush.bf16.xpose.msra.mxu0 0
    %3093 = vmatpush.bf16.xpose.msra.mxu0 0
    %3094 = vmatpush.bf16.xpose.msra.mxu0 %v2335
    %3095 = vmatmul.bf16.gmra.mxu0 %v2011
    %v3096 = vpop.f32.mrf.mxu0
    %v3097 = vadd.f32 %v3084, %v3096
    %v3098 = vpop.f32.mrf.mxu0
    %3099 = vdwg.mxu0
    %3100 = vmatpush.bf16.xpose.msra.mxu0 0
    %3101 = vmatpush.bf16.xpose.msra.mxu0 0
    %3102 = vmatpush.bf16.xpose.msra.mxu0 0
    %3103 = vmatpush.bf16.xpose.msra.mxu0 0
    %3104 = vmatpush.bf16.xpose.msra.mxu0 0
    %3105 = vmatpush.bf16.xpose.msra.mxu0 0
    %3106 = vmatpush.bf16.xpose.msra.mxu0 0
    %3107 = vmatpush.bf16.xpose.msra.mxu0 %v2336
    %3108 = vmatmul.bf16.gmra.mxu0 %v2012
    %v3109 = vpop.f32.mrf.mxu0
    %v3110 = vadd.f32 %v3097, %v3109
    %v3111 = vpop.f32.mrf.mxu0
    %3112 = vdwg.mxu0
    %3113 = vmatpush.bf16.xpose.msra.mxu0 0
    %3114 = vmatpush.bf16.xpose.msra.mxu0 0
    %3115 = vmatpush.bf16.xpose.msra.mxu0 0
    %3116 = vmatpush.bf16.xpose.msra.mxu0 0
    %3117 = vmatpush.bf16.xpose.msra.mxu0 0
    %3118 = vmatpush.bf16.xpose.msra.mxu0 0
    %3119 = vmatpush.bf16.xpose.msra.mxu0 0
    %3120 = vmatpush.bf16.xpose.msra.mxu0 %v2337
    %3121 = vmatmul.bf16.gmra.mxu0 %v2013
    %v3122 = vpop.f32.mrf.mxu0
    %v3123 = vadd.f32 %v3110, %v3122
    %v3124 = vpop.f32.mrf.mxu0
    %3125 = vdwg.mxu0
    %3126 = vmatpush.bf16.xpose.msra.mxu0 0
    %3127 = vmatpush.bf16.xpose.msra.mxu0 0
    %3128 = vmatpush.bf16.xpose.msra.mxu0 0
    %3129 = vmatpush.bf16.xpose.msra.mxu0 0
    %3130 = vmatpush.bf16.xpose.msra.mxu0 0
    %3131 = vmatpush.bf16.xpose.msra.mxu0 0
    %3132 = vmatpush.bf16.xpose.msra.mxu0 0
    %3133 = vmatpush.bf16.xpose.msra.mxu0 %v2338
    %3134 = vmatmul.bf16.gmra.mxu0 %v2014
    %v3135 = vpop.f32.mrf.mxu0
    %v3136 = vadd.f32 %v3123, %v3135
    %v3137 = vpop.f32.mrf.mxu0
    %3138 = vdwg.mxu0
    %3139 = vmatpush.bf16.xpose.msra.mxu0 0
    %3140 = vmatpush.bf16.xpose.msra.mxu0 0
    %3141 = vmatpush.bf16.xpose.msra.mxu0 0
    %3142 = vmatpush.bf16.xpose.msra.mxu0 0
    %3143 = vmatpush.bf16.xpose.msra.mxu0 0
    %3144 = vmatpush.bf16.xpose.msra.mxu0 0
    %3145 = vmatpush.bf16.xpose.msra.mxu0 0
    %3146 = vmatpush.bf16.xpose.msra.mxu0 %v2339
    %3147 = vmatmul.bf16.gmra.mxu0 %v2015
    %v3148 = vpop.f32.mrf.mxu0
    %v3149 = vadd.f32 %v3136, %v3148
    %v3150 = vpop.f32.mrf.mxu0
    %3151 = vdwg.mxu0
    %3152 = vmatpush.bf16.xpose.msra.mxu0 0
    %3153 = vmatpush.bf16.xpose.msra.mxu0 0
    %3154 = vmatpush.bf16.xpose.msra.mxu0 0
    %3155 = vmatpush.bf16.xpose.msra.mxu0 0
    %3156 = vmatpush.bf16.xpose.msra.mxu0 0
    %3157 = vmatpush.bf16.xpose.msra.mxu0 0
    %3158 = vmatpush.bf16.xpose.msra.mxu0 0
    %3159 = vmatpush.bf16.xpose.msra.mxu0 %v2340
    %3160 = vmatmul.bf16.gmra.mxu0 %v2016
    %v3161 = vpop.f32.mrf.mxu0
    %v3162 = vadd.f32 %v3149, %v3161
    %v3163 = vpop.f32.mrf.mxu0
    %3164 = vdwg.mxu0
    %3165 = vmatpush.bf16.xpose.msra.mxu0 0
    %3166 = vmatpush.bf16.xpose.msra.mxu0 0
    %3167 = vmatpush.bf16.xpose.msra.mxu0 0
    %3168 = vmatpush.bf16.xpose.msra.mxu0 0
    %3169 = vmatpush.bf16.xpose.msra.mxu0 0
    %3170 = vmatpush.bf16.xpose.msra.mxu0 0
    %3171 = vmatpush.bf16.xpose.msra.mxu0 0
    %3172 = vmatpush.bf16.xpose.msra.mxu0 %v2341
    %3173 = vmatmul.bf16.gmra.mxu0 %v2017
    %v3174 = vpop.f32.mrf.mxu0
    %v3175 = vadd.f32 %v3162, %v3174
    %v3176 = vpop.f32.mrf.mxu0
    %3177 = vdwg.mxu0
    %3178 = vmatpush.bf16.xpose.msra.mxu0 0
    %3179 = vmatpush.bf16.xpose.msra.mxu0 0
    %3180 = vmatpush.bf16.xpose.msra.mxu0 0
    %3181 = vmatpush.bf16.xpose.msra.mxu0 0
    %3182 = vmatpush.bf16.xpose.msra.mxu0 0
    %3183 = vmatpush.bf16.xpose.msra.mxu0 0
    %3184 = vmatpush.bf16.xpose.msra.mxu0 0
    %3185 = vmatpush.bf16.xpose.msra.mxu0 %v2342
    %3186 = vmatmul.bf16.gmra.mxu0 %v2018
    %v3187 = vpop.f32.mrf.mxu0
    %v3188 = vadd.f32 %v3175, %v3187
    %v3189 = vpop.f32.mrf.mxu0
    %3190 = vdwg.mxu0
    %3191 = vmatpush.bf16.xpose.msra.mxu0 0
    %3192 = vmatpush.bf16.xpose.msra.mxu0 0
    %3193 = vmatpush.bf16.xpose.msra.mxu0 0
    %3194 = vmatpush.bf16.xpose.msra.mxu0 0
    %3195 = vmatpush.bf16.xpose.msra.mxu0 0
    %3196 = vmatpush.bf16.xpose.msra.mxu0 0
    %3197 = vmatpush.bf16.xpose.msra.mxu0 0
    %3198 = vmatpush.bf16.xpose.msra.mxu0 %v2343
    %3199 = vmatmul.bf16.gmra.mxu0 %v2019
    %v3200 = vpop.f32.mrf.mxu0
    %v3201 = vadd.f32 %v3188, %v3200
    %v3202 = vpop.f32.mrf.mxu0
    %3203 = vdwg.mxu0
    %3204 = vmatpush.bf16.xpose.msra.mxu0 0
    %3205 = vmatpush.bf16.xpose.msra.mxu0 0
    %3206 = vmatpush.bf16.xpose.msra.mxu0 0
    %3207 = vmatpush.bf16.xpose.msra.mxu0 0
    %3208 = vmatpush.bf16.xpose.msra.mxu0 0
    %3209 = vmatpush.bf16.xpose.msra.mxu0 0
    %3210 = vmatpush.bf16.xpose.msra.mxu0 0
    %3211 = vmatpush.bf16.xpose.msra.mxu0 %v2344
    %3212 = vmatmul.bf16.gmra.mxu0 %v2020
    %v3213 = vpop.f32.mrf.mxu0
    %v3214 = vadd.f32 %v3201, %v3213
    %v3215 = vpop.f32.mrf.mxu0
    %3216 = vdwg.mxu0
    %3217 = vmatpush.bf16.xpose.msra.mxu0 0
    %3218 = vmatpush.bf16.xpose.msra.mxu0 0
    %3219 = vmatpush.bf16.xpose.msra.mxu0 0
    %3220 = vmatpush.bf16.xpose.msra.mxu0 0
    %3221 = vmatpush.bf16.xpose.msra.mxu0 0
    %3222 = vmatpush.bf16.xpose.msra.mxu0 0
    %3223 = vmatpush.bf16.xpose.msra.mxu0 0
    %3224 = vmatpush.bf16.xpose.msra.mxu0 %v2345
    %3225 = vmatmul.bf16.gmra.mxu0 %v2021
    %v3226 = vpop.f32.mrf.mxu0
    %v3227 = vadd.f32 %v3214, %v3226
    %v3228 = vpop.f32.mrf.mxu0
    %3229 = vdwg.mxu0
    %3230 = vmatpush.bf16.xpose.msra.mxu0 0
    %3231 = vmatpush.bf16.xpose.msra.mxu0 0
    %3232 = vmatpush.bf16.xpose.msra.mxu0 0
    %3233 = vmatpush.bf16.xpose.msra.mxu0 0
    %3234 = vmatpush.bf16.xpose.msra.mxu0 0
    %3235 = vmatpush.bf16.xpose.msra.mxu0 0
    %3236 = vmatpush.bf16.xpose.msra.mxu0 0
    %3237 = vmatpush.bf16.xpose.msra.mxu0 %v2346
    %3238 = vmatmul.bf16.gmra.mxu0 %v2022
    %v3239 = vpop.f32.mrf.mxu0
    %v3240 = vadd.f32 %v3227, %v3239
    %v3241 = vpop.f32.mrf.mxu0
    %3242 = vdwg.mxu0
    %vm3243 = vcmask 74752
    %3244 = vst.msk [vmem:[#allocation10] sm:$0x3] %vm3243, %v3240
    // Predicated region
    $region38: #{tpu_custom_call.1} parent=1 // pred_check
      _
    $region39: #{tpu_custom_call.1} parent=1 // pred_check_branch
      %3246 = sbr.rel (0) target = $region41
    $region40: #{tpu_custom_call.1} parent=1 // pred_region
      %3248 = vsyncadd [#allocation4], 0
      %s3250 = sshll.u32 [#allocation10], 4
      %s3251 = int_to_ptr.vmem [resolvable:$true] %s3250
      %s3252 = sshll.u32 %s5, 4
      %s3253 = int_to_ptr.hbm [resolvable:$true] %s3252
      %3255 = dma.vmem_to_hbm [thread:$0]  %s3251, 32, %s3253, [#allocation4]
    $region41: #{tpu_custom_call.1} parent=1 // pred_fallthru
      _
    // Predicated region
    $region42: #{tpu_custom_call.1} parent=1 // pred_check
      _
    $region43: #{tpu_custom_call.1} parent=1 // pred_check_branch
      %3257 = sbr.rel (0) target = $region45
    $region44: #{tpu_custom_call.1} parent=1 // pred_region
      %3259 = dma.done [#allocation4], 32
    $region45: #{tpu_custom_call.1} parent=1 // pred_fallthru
      _
    %3260 = vsyncpa [#allocation3], 1
    %3261 = vsyncpa [#allocation6], 1
    %3262 = vsyncpa [#allocation9], 1
    %3263 = vsyncpa [#allocation4], 1

</llo_original>
